<compile_context>
chip_gen: v7x
topology: tpu7x:2x2x1
jax: 0.10.0
libtpu: 0.0.40
codegen_flags: <defaults>
</compile_context>

<pallas_src>
import jax
import jax.numpy as jnp
from jax.experimental import pallas as pl
from jax.experimental.pallas import tpu as pltpu

# --- model / problem sizes (small, consistent with the PyTorch module) ---
B, L = 2, 8            # batch, source sequence length
E, M = 16, 16          # encoder_dim, embedding_dim
D, A = 32, 32          # decoder_dim, attention_dim
V = 40                 # output_dim (vocab size)
VPAD = 128             # lane-dense padded output width (V=40 -> 128)
T = 4                  # fused decode timesteps (teacher-forced ids provided)

G = 2 * D              # per-gate width of the fused bidirectional cell
GATE_ORDER = (0, 1, 3, 2)   # PyTorch row blocks [i, f, g, o] -> packed column order [i, f, o, g]


def _sigmoid(x):
    # one EUP tanh instead of exp + divide
    return 0.5 * jnp.tanh(0.5 * x) + 0.5


def decoder_kernel(emb_ref, enc_ref, h0_ref, c0_ref,
                   u_T_ref, w_T_ref, w_b_ref, a_w_ref,
                   w_gate_ref, b_gate_ref,
                   fcw_x_ref, fcw_h_ref, fc_b_ref,
                   pred_ref, hout_ref, cout_ref):
    t_steps = emb_ref.shape[0]

    enc = enc_ref[...]                       # [B, L, E]
    u_T = u_T_ref[...]
    w_T = w_T_ref[...]
    w_b = w_b_ref[...]
    a_w = a_w_ref[...]
    w_gate = w_gate_ref[...]
    b_gate = b_gate_ref[...]
    fcw_x = fcw_x_ref[...]
    fcw_h = fcw_h_ref[...]
    fc_b = fc_b_ref[...]

    h = h0_ref[...]                          # [B, 2D] = [h_fwd | h_rev]
    c = c0_ref[...]

    # Loop-invariant U @ encoder_outputs, computed once; per-batch 2-D dots
    # avoid the (B,L,E) -> (B*L,E) relayout reshape.
    uhs = jnp.stack(
        [jnp.dot(enc_ref[b], u_T, preferred_element_type=jnp.float32)
         for b in range(B)], axis=0)         # [B, L, A]

    # T is small & static: trace-time full unroll (== lax.fori_loop(..., unroll=True)).
    for t in range(t_steps):
        emb = emb_ref[t]                     # [B, M]  (pre-gathered; dropout = identity)

        # ---------------- Attention(encoder_outputs, hidden[0]) ----------------
        w_ah = jnp.dot(h[:, :D], w_T, preferred_element_type=jnp.float32) + w_b   # [B, A]
        comb = jnp.tanh(uhs + w_ah[:, None, :])                                   # [B, L, A]
        # keep L on the sublane axis through the softmax: [B, L, 1] end-to-end
        scores = jnp.sum(comb * a_w, axis=-1, keepdims=True)                      # [B, L, 1]
        mx = jnp.max(scores, axis=1, keepdims=True)
        ex = jnp.exp(scores - mx)
        attn = ex / jnp.sum(ex, axis=1, keepdims=True)                            # exact softmax
        # weighted = bmm(attn.unsqueeze(1), encoder_outputs).squeeze(1)
        weighted = jnp.sum(attn * enc, axis=1)                                    # [B, E]

        # ---- fused bidirectional LSTM cell: ONE gate matmul on [emb|weighted|h] ----
        x_xw = jnp.concatenate([emb, weighted], axis=1)                           # [B, M+E]
        x_full = jnp.concatenate([x_xw, h], axis=1)                               # [B, M+E+2D]
        gates = jnp.dot(x_full, w_gate,
                        preferred_element_type=jnp.float32) + b_gate              # [B, 8D]
        sig = _sigmoid(gates[:, :3 * G])         # contiguous [i | f | o] block
        i_g = sig[:, 0 * G:1 * G]
        f_g = sig[:, 1 * G:2 * G]
        o_g = sig[:, 2 * G:3 * G]
        g_g = jnp.tanh(gates[:, 3 * G:])
        c = f_g * c + i_g * g_g                                                   # [B, 2D]
        h = o_g * jnp.tanh(c)                                                     # [B, 2D] = [hf|hr]

        # -------- fc_out(cat(output, weighted, embedded)), lane-padded to 128 --------
        pred = (jnp.dot(x_xw, fcw_x, preferred_element_type=jnp.float32)
                + jnp.dot(h, fcw_h, preferred_element_type=jnp.float32)
                + fc_b)                                                           # [B, 128]
        pred_ref[t] = pred

    hout_ref[...] = h
    cout_ref[...] = c


# -------------------- host-side weight preprocessing (done once) --------------------
def prepare_inputs(params, hidden):
    def gblk(w, g):                          # PyTorch gate order rows: [i, f, g, o]
        return w[g * D:(g + 1) * D, :]

    # Stacked gate weight: rows [emb(M) | weighted(E) | h_cat(2D)],
    # columns per packed gate p (order i,f,o,g): [fwd(D) | rev(D)].
    w_gate = jnp.zeros((M + E + 2 * D, 8 * D), jnp.float32)
    b_parts = []
    for p, g in enumerate(GATE_ORDER):
        c0 = p * 2 * D
        # forward direction
        w_gate = w_gate.at[0:M,             c0:c0 + D].set(gblk(params['wih_f'], g)[:, 0:M].T)
        w_gate = w_gate.at[M:M + E,         c0:c0 + D].set(gblk(params['wih_f'], g)[:, M:M + E].T)
        w_gate = w_gate.at[M + E:M + E + D, c0:c0 + D].set(gblk(params['whh_f'], g).T)
        # reverse direction
        w_gate = w_gate.at[0:M,                     c0 + D:c0 + 2 * D].set(gblk(params['wih_r'], g)[:, 0:M].T)
        w_gate = w_gate.at[M:M + E,                 c0 + D:c0 + 2 * D].set(gblk(params['wih_r'], g)[:, M:M + E].T)
        w_gate = w_gate.at[M + E + D:M + E + 2 * D, c0 + D:c0 + 2 * D].set(gblk(params['whh_r'], g).T)
        b_parts.append((params['bih_f'] + params['bhh_f'])[g * D:(g + 1) * D])
        b_parts.append((params['bih_r'] + params['bhh_r'])[g * D:(g + 1) * D])
    b_gate = jnp.concatenate(b_parts).reshape(1, 8 * D)

    # fc_out weight, split into [emb|weighted] and h parts; lane-padded V -> VPAD
    fc_W = params['fc_W']                    # [V, 2D+E+M], columns [output | weighted | emb]
    fcw_x = jnp.zeros((M + E, VPAD), jnp.float32)
    fcw_x = fcw_x.at[0:M, 0:V].set(fc_W[:, 2 * D + E:].T)        # emb part
    fcw_x = fcw_x.at[M:M + E, 0:V].set(fc_W[:, 2 * D:2 * D + E].T)   # weighted part
    fcw_h = jnp.zeros((2 * D, VPAD), jnp.float32).at[:, 0:V].set(fc_W[:, 0:2 * D].T)
    fc_b = jnp.zeros((1, VPAD), jnp.float32).at[0, 0:V].set(params['fc_b'])

    h, c = hidden
    return dict(
        h_cat=jnp.concatenate([h[0], h[1]], axis=1),             # [B, 2D]
        c_cat=jnp.concatenate([c[0], c[1]], axis=1),
        u_T=params['att_U_w'].T, w_T=params['att_W_w'].T,
        w_b=params['att_W_b'].reshape(1, A), a_w=params['att_A_w'],
        w_gate=w_gate, b_gate=b_gate,
        fcw_x=fcw_x, fcw_h=fcw_h, fc_b=fc_b,
    )


@jax.jit
def decoder_forward(params, input_ids_tb, encoder_outputs, hidden):
    """Runs T fused decode steps (teacher-forced ids [T, B]) in ONE single-program pallas_call."""
    w = prepare_inputs(params, hidden)
    emb_seq = params['emb_table'][input_ids_tb]                  # safe gather -> [T, B, M]
    t_steps = input_ids_tb.shape[0]

    vmem = pl.BlockSpec(memory_space=pltpu.MemorySpace.VMEM)     # whole array, VMEM resident

    preds_pad, h_out, c_out = pl.pallas_call(
        decoder_kernel,
        out_shape=(jax.ShapeDtypeStruct((t_steps, B, VPAD), jnp.float32),
                   jax.ShapeDtypeStruct((B, 2 * D), jnp.float32),
                   jax.ShapeDtypeStruct((B, 2 * D), jnp.float32)),
        in_specs=[vmem] * 13,
        out_specs=(vmem, vmem, vmem),
    )(emb_seq, encoder_outputs, w['h_cat'], w['c_cat'],
      w['u_T'], w['w_T'], w['w_b'], w['a_w'],
      w['w_gate'], w['b_gate'], w['fcw_x'], w['fcw_h'], w['fc_b'])

    preds = preds_pad[:, :, :V]                                  # drop lane padding
    h_out = jnp.stack([h_out[:, :D], h_out[:, D:]], axis=0)      # back to [2, B, D]
    c_out = jnp.stack([c_out[:, :D], c_out[:, D:]], axis=0)
    return preds, (h_out, c_out)


# ---------------- pure-JAX reference (PyTorch semantics, step-by-step) ----------------
def decoder_reference(params, input_ids_tb, encoder_outputs, hidden):
    h, c = hidden
    preds = []
    for t in range(input_ids_tb.shape[0]):
        emb = params['emb_table'][input_ids_tb[t]]
        u_hs = encoder_outputs @ params['att_U_w'].T
        w_ah = h[0] @ params['att_W_w'].T + params['att_W_b']
        comb = jnp.tanh(u_hs + w_ah[:, None, :])
        scores = (comb @ params['att_A_w'].T)[..., 0]
        attn = jax.nn.softmax(scores, axis=1)
        weighted = jnp.einsum('bl,ble->be', attn, encoder_outputs)
        x = jnp.concatenate([emb, weighted], axis=1)

        def cell(x, h_, c_, wih, whh, bih, bhh):
            gates = x @ wih.T + bih + h_ @ whh.T + bhh
            i, f, g, o = jnp.split(gates, 4, axis=1)
            i, f, o = jax.nn.sigmoid(i), jax.nn.sigmoid(f), jax.nn.sigmoid(o)
            g = jnp.tanh(g)
            cn = f * c_ + i * g
            hn = o * jnp.tanh(cn)
            return hn, cn

        hf, cf = cell(x, h[0], c[0], params['wih_f'], params['whh_f'],
                      params['bih_f'], params['bhh_f'])
        hr, cr = cell(x, h[1], c[1], params['wih_r'], params['whh_r'],
                      params['bih_r'], params['bhh_r'])
        output = jnp.concatenate([hf, hr], axis=1)
        cat = jnp.concatenate([output, weighted, emb], axis=1)
        preds.append(cat @ params['fc_W'].T + params['fc_b'])
        h = jnp.stack([hf, hr])
        c = jnp.stack([cf, cr])
    return jnp.stack(preds, axis=0), (h, c)


def init_params(key):
    ks = jax.random.split(key, 15)

    def w(k, shape, scale=0.1):
        return (scale * jax.random.normal(k, shape)).astype(jnp.float32)

    return {
        'emb_table': w(ks[0], (V, M)),
        'att_W_w':   w(ks[1], (A, D)),
        'att_W_b':   w(ks[2], (A,)),
        'att_U_w':   w(ks[3], (A, E)),
        'att_A_w':   w(ks[4], (1, A)),
        'wih_f':     w(ks[5], (4 * D, E + M)),
        'whh_f':     w(ks[6], (4 * D, D)),
        'bih_f':     w(ks[7], (4 * D,)),
        'bhh_f':     w(ks[8], (4 * D,)),
        'wih_r':     w(ks[9], (4 * D, E + M)),
        'whh_r':     w(ks[10], (4 * D, D)),
        'bih_r':     w(ks[11], (4 * D,)),
        'bhh_r':     w(ks[12], (4 * D,)),
        'fc_W':      w(ks[13], (V, E + 2 * D + M)),
        'fc_b':      w(ks[14], (V,)),
    }


if __name__ == "__main__":
    key = jax.random.PRNGKey(0)
    k_par, k_ids, k_enc, k_h, k_c = jax.random.split(key, 5)

    params = init_params(k_par)
    input_ids = jax.random.randint(k_ids, (T, B), 0, V)           # teacher-forced ids
    encoder_outputs = (0.5 * jax.random.normal(k_enc, (B, L, E))).astype(jnp.float32)
    h0 = (0.1 * jax.random.normal(k_h, (2, B, D))).astype(jnp.float32)
    c0 = (0.1 * jax.random.normal(k_c, (2, B, D))).astype(jnp.float32)

    preds, (h_out, c_out) = decoder_forward(params, input_ids, encoder_outputs, (h0, c0))
    jax.block_until_ready((preds, h_out, c_out))

    ref_preds, (ref_h, ref_c) = decoder_reference(params, input_ids, encoder_outputs,
                                                  (h0, c0))
    assert preds.shape == (T, B, V)
    assert h_out.shape == (2, B, D) and c_out.shape == (2, B, D)
    assert jnp.allclose(preds, ref_preds, atol=2e-3, rtol=2e-3)
    assert jnp.allclose(h_out, ref_h, atol=2e-3, rtol=2e-3)
    assert jnp.allclose(c_out, ref_c, atol=2e-3, rtol=2e-3)

    print("KERNEL_OK")
</pallas_src>

<mosaic_0001>
module attributes {stable_mosaic.version = 11 : i64} {
  func.func @decoder_kernel(%arg0: memref<4x2x16xf32, #tpu.memory_space<vmem>>, %arg1: memref<2x8x16xf32, #tpu.memory_space<vmem>>, %arg2: memref<2x64xf32, #tpu.memory_space<vmem>>, %arg3: memref<2x64xf32, #tpu.memory_space<vmem>>, %arg4: memref<16x32xf32, #tpu.memory_space<vmem>>, %arg5: memref<32x32xf32, #tpu.memory_space<vmem>>, %arg6: memref<1x32xf32, #tpu.memory_space<vmem>>, %arg7: memref<1x32xf32, #tpu.memory_space<vmem>>, %arg8: memref<96x256xf32, #tpu.memory_space<vmem>>, %arg9: memref<1x256xf32, #tpu.memory_space<vmem>>, %arg10: memref<32x128xf32, #tpu.memory_space<vmem>>, %arg11: memref<64x128xf32, #tpu.memory_space<vmem>>, %arg12: memref<1x128xf32, #tpu.memory_space<vmem>>, %arg13: memref<4x2x128xf32, #tpu.memory_space<vmem>>, %arg14: memref<2x64xf32, #tpu.memory_space<vmem>>, %arg15: memref<2x64xf32, #tpu.memory_space<vmem>>) attributes {dimension_semantics = [], scalar_prefetch = 0 : i64, scratch_operands = 0 : i64, tpu.core_type = #tpu.core_type<tc>} {
    %c0 = arith.constant 0 : index
    %c0_0 = arith.constant 0 : index
    %c0_1 = arith.constant 0 : index
    %0 = vector.load %arg1[%c0, %c0_0, %c0_1] : memref<2x8x16xf32, #tpu.memory_space<vmem>>, vector<2x8x16xf32>
    %c0_2 = arith.constant 0 : index
    %c0_3 = arith.constant 0 : index
    %1 = vector.load %arg4[%c0_2, %c0_3] : memref<16x32xf32, #tpu.memory_space<vmem>>, vector<16x32xf32>
    %c0_4 = arith.constant 0 : index
    %c0_5 = arith.constant 0 : index
    %2 = vector.load %arg5[%c0_4, %c0_5] : memref<32x32xf32, #tpu.memory_space<vmem>>, vector<32x32xf32>
    %c0_6 = arith.constant 0 : index
    %c0_7 = arith.constant 0 : index
    %3 = vector.load %arg6[%c0_6, %c0_7] : memref<1x32xf32, #tpu.memory_space<vmem>>, vector<1x32xf32>
    %c0_8 = arith.constant 0 : index
    %c0_9 = arith.constant 0 : index
    %4 = vector.load %arg7[%c0_8, %c0_9] : memref<1x32xf32, #tpu.memory_space<vmem>>, vector<1x32xf32>
    %c0_10 = arith.constant 0 : index
    %c0_11 = arith.constant 0 : index
    %5 = vector.load %arg8[%c0_10, %c0_11] : memref<96x256xf32, #tpu.memory_space<vmem>>, vector<96x256xf32>
    %c0_12 = arith.constant 0 : index
    %c0_13 = arith.constant 0 : index
    %6 = vector.load %arg9[%c0_12, %c0_13] : memref<1x256xf32, #tpu.memory_space<vmem>>, vector<1x256xf32>
    %c0_14 = arith.constant 0 : index
    %c0_15 = arith.constant 0 : index
    %7 = vector.load %arg10[%c0_14, %c0_15] : memref<32x128xf32, #tpu.memory_space<vmem>>, vector<32x128xf32>
    %c0_16 = arith.constant 0 : index
    %c0_17 = arith.constant 0 : index
    %8 = vector.load %arg11[%c0_16, %c0_17] : memref<64x128xf32, #tpu.memory_space<vmem>>, vector<64x128xf32>
    %c0_18 = arith.constant 0 : index
    %c0_19 = arith.constant 0 : index
    %9 = vector.load %arg12[%c0_18, %c0_19] : memref<1x128xf32, #tpu.memory_space<vmem>>, vector<1x128xf32>
    %c0_20 = arith.constant 0 : index
    %c0_21 = arith.constant 0 : index
    %10 = vector.load %arg2[%c0_20, %c0_21] : memref<2x64xf32, #tpu.memory_space<vmem>>, vector<2x64xf32>
    %c0_22 = arith.constant 0 : index
    %c0_23 = arith.constant 0 : index
    %11 = vector.load %arg3[%c0_22, %c0_23] : memref<2x64xf32, #tpu.memory_space<vmem>>, vector<2x64xf32>
    %c0_24 = arith.constant 0 : index
    %c0_25 = arith.constant 0 : index
    %c0_26 = arith.constant 0 : index
    %12 = vector.load %arg1[%c0_24, %c0_25, %c0_26] : memref<2x8x16xf32, #tpu.memory_space<vmem>>, vector<1x8x16xf32>
    %13 = vector.shape_cast %12 : vector<1x8x16xf32> to vector<8x16xf32>
    %cst = arith.constant dense<0.000000e+00> : vector<8x32xf32>
    %14 = tpu.matmul %13, %1, %cst {dimension_numbers = #tpu.dot_dimension_numbers<[1], [0], [0], [1], [0, 0, 1, 1], [], []>} : vector<8x16xf32>, vector<16x32xf32>, vector<8x32xf32> -> vector<8x32xf32>
    %c1 = arith.constant 1 : index
    %c0_27 = arith.constant 0 : index
    %c0_28 = arith.constant 0 : index
    %15 = vector.load %arg1[%c1, %c0_27, %c0_28] : memref<2x8x16xf32, #tpu.memory_space<vmem>>, vector<1x8x16xf32>
    %16 = vector.shape_cast %15 : vector<1x8x16xf32> to vector<8x16xf32>
    %cst_29 = arith.constant dense<0.000000e+00> : vector<8x32xf32>
    %17 = tpu.matmul %16, %1, %cst_29 {dimension_numbers = #tpu.dot_dimension_numbers<[1], [0], [0], [1], [0, 0, 1, 1], [], []>} : vector<8x16xf32>, vector<16x32xf32>, vector<8x32xf32> -> vector<8x32xf32>
    %18 = vector.shape_cast %14 : vector<8x32xf32> to vector<1x8x32xf32>
    %19 = vector.shape_cast %17 : vector<8x32xf32> to vector<1x8x32xf32>
    %20 = tpu.concatenate %18, %19 in 0 : vector<1x8x32xf32>, vector<1x8x32xf32> -> vector<2x8x32xf32>
    %c0_30 = arith.constant 0 : index
    %c0_31 = arith.constant 0 : index
    %c0_32 = arith.constant 0 : index
    %21 = vector.load %arg0[%c0_30, %c0_31, %c0_32] : memref<4x2x16xf32, #tpu.memory_space<vmem>>, vector<1x2x16xf32>
    %22 = vector.shape_cast %21 : vector<1x2x16xf32> to vector<2x16xf32>
    %23 = vector.extract_strided_slice %10 {offsets = [0, 0], sizes = [2, 32], strides = [1, 1]} : vector<2x64xf32> to vector<2x32xf32>
    %cst_33 = arith.constant dense<0.000000e+00> : vector<2x32xf32>
    %24 = tpu.matmul %23, %2, %cst_33 {dimension_numbers = #tpu.dot_dimension_numbers<[1], [0], [0], [1], [0, 0, 1, 1], [], []>} : vector<2x32xf32>, vector<32x32xf32>, vector<2x32xf32> -> vector<2x32xf32>
    %25 = vector.broadcast %3 : vector<1x32xf32> to vector<2x32xf32>
    %26 = arith.addf %24, %25 : vector<2x32xf32>
    %27 = vector.shape_cast %26 : vector<2x32xf32> to vector<2x1x32xf32>
    %28 = vector.broadcast %27 : vector<2x1x32xf32> to vector<2x8x32xf32>
    %29 = arith.addf %20, %28 : vector<2x8x32xf32>
    %30 = math.tanh %29 : vector<2x8x32xf32>
    %31 = vector.shape_cast %4 : vector<1x32xf32> to vector<1x1x32xf32>
    %32 = vector.broadcast %31 : vector<1x1x32xf32> to vector<2x8x32xf32>
    %33 = arith.mulf %30, %32 : vector<2x8x32xf32>
    %cst_34 = arith.constant dense<0.000000e+00> : vector<2x8xf32>
    %34 = vector.multi_reduction <add>, %33, %cst_34 [2] : vector<2x8x32xf32> to vector<2x8xf32>
    %35 = vector.shape_cast %34 : vector<2x8xf32> to vector<2x8x1xf32>
    %cst_35 = arith.constant dense<0xFF800000> : vector<2x1xf32>
    %36 = vector.multi_reduction <maximumf>, %35, %cst_35 [1] : vector<2x8x1xf32> to vector<2x1xf32>
    %37 = vector.shape_cast %36 : vector<2x1xf32> to vector<2x1x1xf32>
    %38 = vector.broadcast %37 : vector<2x1x1xf32> to vector<2x8x1xf32>
    %39 = arith.subf %35, %38 : vector<2x8x1xf32>
    %40 = math.exp %39 : vector<2x8x1xf32>
    %cst_36 = arith.constant dense<0.000000e+00> : vector<2x1xf32>
    %41 = vector.multi_reduction <add>, %40, %cst_36 [1] : vector<2x8x1xf32> to vector<2x1xf32>
    %42 = vector.shape_cast %41 : vector<2x1xf32> to vector<2x1x1xf32>
    %43 = vector.broadcast %42 : vector<2x1x1xf32> to vector<2x8x1xf32>
    %44 = arith.divf %40, %43 : vector<2x8x1xf32>
    %45 = vector.broadcast %44 : vector<2x8x1xf32> to vector<2x8x16xf32>
    %46 = arith.mulf %45, %0 : vector<2x8x16xf32>
    %cst_37 = arith.constant dense<0.000000e+00> : vector<2x16xf32>
    %47 = vector.multi_reduction <add>, %46, %cst_37 [1] : vector<2x8x16xf32> to vector<2x16xf32>
    %48 = tpu.concatenate %22, %47 in 1 : vector<2x16xf32>, vector<2x16xf32> -> vector<2x32xf32>
    %49 = tpu.concatenate %48, %10 in 1 : vector<2x32xf32>, vector<2x64xf32> -> vector<2x96xf32>
    %cst_38 = arith.constant dense<0.000000e+00> : vector<2x256xf32>
    %50 = tpu.matmul %49, %5, %cst_38 {dimension_numbers = #tpu.dot_dimension_numbers<[1], [0], [0], [1], [0, 0, 1, 1], [], []>} : vector<2x96xf32>, vector<96x256xf32>, vector<2x256xf32> -> vector<2x256xf32>
    %51 = vector.broadcast %6 : vector<1x256xf32> to vector<2x256xf32>
    %52 = arith.addf %50, %51 : vector<2x256xf32>
    %53 = vector.extract_strided_slice %52 {offsets = [0, 0], sizes = [2, 192], strides = [1, 1]} : vector<2x256xf32> to vector<2x192xf32>
    %cst_39 = arith.constant 5.000000e-01 : f32
    %54 = vector.broadcast %cst_39 : f32 to vector<2x192xf32>
    %55 = arith.mulf %54, %53 : vector<2x192xf32>
    %56 = math.tanh %55 : vector<2x192xf32>
    %cst_40 = arith.constant 5.000000e-01 : f32
    %57 = vector.broadcast %cst_40 : f32 to vector<2x192xf32>
    %58 = arith.mulf %57, %56 : vector<2x192xf32>
    %cst_41 = arith.constant 5.000000e-01 : f32
    %59 = vector.broadcast %cst_41 : f32 to vector<2x192xf32>
    %60 = arith.addf %58, %59 : vector<2x192xf32>
    %61 = vector.extract_strided_slice %60 {offsets = [0, 0], sizes = [2, 64], strides = [1, 1]} : vector<2x192xf32> to vector<2x64xf32>
    %62 = vector.extract_strided_slice %60 {offsets = [0, 64], sizes = [2, 64], strides = [1, 1]} : vector<2x192xf32> to vector<2x64xf32>
    %63 = vector.extract_strided_slice %60 {offsets = [0, 128], sizes = [2, 64], strides = [1, 1]} : vector<2x192xf32> to vector<2x64xf32>
    %64 = vector.extract_strided_slice %52 {offsets = [0, 192], sizes = [2, 64], strides = [1, 1]} : vector<2x256xf32> to vector<2x64xf32>
    %65 = math.tanh %64 : vector<2x64xf32>
    %66 = arith.mulf %62, %11 : vector<2x64xf32>
    %67 = arith.mulf %61, %65 : vector<2x64xf32>
    %68 = arith.addf %66, %67 : vector<2x64xf32>
    %69 = math.tanh %68 : vector<2x64xf32>
    %70 = arith.mulf %63, %69 : vector<2x64xf32>
    %cst_42 = arith.constant dense<0.000000e+00> : vector<2x128xf32>
    %71 = tpu.matmul %48, %7, %cst_42 {dimension_numbers = #tpu.dot_dimension_numbers<[1], [0], [0], [1], [0, 0, 1, 1], [], []>} : vector<2x32xf32>, vector<32x128xf32>, vector<2x128xf32> -> vector<2x128xf32>
    %cst_43 = arith.constant dense<0.000000e+00> : vector<2x128xf32>
    %72 = tpu.matmul %70, %8, %cst_43 {dimension_numbers = #tpu.dot_dimension_numbers<[1], [0], [0], [1], [0, 0, 1, 1], [], []>} : vector<2x64xf32>, vector<64x128xf32>, vector<2x128xf32> -> vector<2x128xf32>
    %73 = arith.addf %71, %72 : vector<2x128xf32>
    %74 = vector.broadcast %9 : vector<1x128xf32> to vector<2x128xf32>
    %75 = arith.addf %73, %74 : vector<2x128xf32>
    %c0_44 = arith.constant 0 : index
    %c0_45 = arith.constant 0 : index
    %c0_46 = arith.constant 0 : index
    %76 = vector.load %arg13[%c0_44, %c0_45, %c0_46] : memref<4x2x128xf32, #tpu.memory_space<vmem>>, vector<1x2x128xf32>
    %77 = vector.shape_cast %76 : vector<1x2x128xf32> to vector<2x128xf32>
    %78 = vector.shape_cast %75 : vector<2x128xf32> to vector<1x2x128xf32>
    tpu.vector_store %arg13[%c0_44, %c0_45, %c0_46], %78 {strides = array<i32>} : memref<4x2x128xf32, #tpu.memory_space<vmem>>, vector<1x2x128xf32>,
    %c1_47 = arith.constant 1 : index
    %c0_48 = arith.constant 0 : index
    %c0_49 = arith.constant 0 : index
    %79 = vector.load %arg0[%c1_47, %c0_48, %c0_49] : memref<4x2x16xf32, #tpu.memory_space<vmem>>, vector<1x2x16xf32>
    %80 = vector.shape_cast %79 : vector<1x2x16xf32> to vector<2x16xf32>
    %81 = vector.extract_strided_slice %70 {offsets = [0, 0], sizes = [2, 32], strides = [1, 1]} : vector<2x64xf32> to vector<2x32xf32>
    %cst_50 = arith.constant dense<0.000000e+00> : vector<2x32xf32>
    %82 = tpu.matmul %81, %2, %cst_50 {dimension_numbers = #tpu.dot_dimension_numbers<[1], [0], [0], [1], [0, 0, 1, 1], [], []>} : vector<2x32xf32>, vector<32x32xf32>, vector<2x32xf32> -> vector<2x32xf32>
    %83 = vector.broadcast %3 : vector<1x32xf32> to vector<2x32xf32>
    %84 = arith.addf %82, %83 : vector<2x32xf32>
    %85 = vector.shape_cast %84 : vector<2x32xf32> to vector<2x1x32xf32>
    %86 = vector.broadcast %85 : vector<2x1x32xf32> to vector<2x8x32xf32>
    %87 = arith.addf %20, %86 : vector<2x8x32xf32>
    %88 = math.tanh %87 : vector<2x8x32xf32>
    %89 = vector.shape_cast %4 : vector<1x32xf32> to vector<1x1x32xf32>
    %90 = vector.broadcast %89 : vector<1x1x32xf32> to vector<2x8x32xf32>
    %91 = arith.mulf %88, %90 : vector<2x8x32xf32>
    %cst_51 = arith.constant dense<0.000000e+00> : vector<2x8xf32>
    %92 = vector.multi_reduction <add>, %91, %cst_51 [2] : vector<2x8x32xf32> to vector<2x8xf32>
    %93 = vector.shape_cast %92 : vector<2x8xf32> to vector<2x8x1xf32>
    %cst_52 = arith.constant dense<0xFF800000> : vector<2x1xf32>
    %94 = vector.multi_reduction <maximumf>, %93, %cst_52 [1] : vector<2x8x1xf32> to vector<2x1xf32>
    %95 = vector.shape_cast %94 : vector<2x1xf32> to vector<2x1x1xf32>
    %96 = vector.broadcast %95 : vector<2x1x1xf32> to vector<2x8x1xf32>
    %97 = arith.subf %93, %96 : vector<2x8x1xf32>
    %98 = math.exp %97 : vector<2x8x1xf32>
    %cst_53 = arith.constant dense<0.000000e+00> : vector<2x1xf32>
    %99 = vector.multi_reduction <add>, %98, %cst_53 [1] : vector<2x8x1xf32> to vector<2x1xf32>
    %100 = vector.shape_cast %99 : vector<2x1xf32> to vector<2x1x1xf32>
    %101 = vector.broadcast %100 : vector<2x1x1xf32> to vector<2x8x1xf32>
    %102 = arith.divf %98, %101 : vector<2x8x1xf32>
    %103 = vector.broadcast %102 : vector<2x8x1xf32> to vector<2x8x16xf32>
    %104 = arith.mulf %103, %0 : vector<2x8x16xf32>
    %cst_54 = arith.constant dense<0.000000e+00> : vector<2x16xf32>
    %105 = vector.multi_reduction <add>, %104, %cst_54 [1] : vector<2x8x16xf32> to vector<2x16xf32>
    %106 = tpu.concatenate %80, %105 in 1 : vector<2x16xf32>, vector<2x16xf32> -> vector<2x32xf32>
    %107 = tpu.concatenate %106, %70 in 1 : vector<2x32xf32>, vector<2x64xf32> -> vector<2x96xf32>
    %cst_55 = arith.constant dense<0.000000e+00> : vector<2x256xf32>
    %108 = tpu.matmul %107, %5, %cst_55 {dimension_numbers = #tpu.dot_dimension_numbers<[1], [0], [0], [1], [0, 0, 1, 1], [], []>} : vector<2x96xf32>, vector<96x256xf32>, vector<2x256xf32> -> vector<2x256xf32>
    %109 = vector.broadcast %6 : vector<1x256xf32> to vector<2x256xf32>
    %110 = arith.addf %108, %109 : vector<2x256xf32>
    %111 = vector.extract_strided_slice %110 {offsets = [0, 0], sizes = [2, 192], strides = [1, 1]} : vector<2x256xf32> to vector<2x192xf32>
    %cst_56 = arith.constant 5.000000e-01 : f32
    %112 = vector.broadcast %cst_56 : f32 to vector<2x192xf32>
    %113 = arith.mulf %112, %111 : vector<2x192xf32>
    %114 = math.tanh %113 : vector<2x192xf32>
    %cst_57 = arith.constant 5.000000e-01 : f32
    %115 = vector.broadcast %cst_57 : f32 to vector<2x192xf32>
    %116 = arith.mulf %115, %114 : vector<2x192xf32>
    %cst_58 = arith.constant 5.000000e-01 : f32
    %117 = vector.broadcast %cst_58 : f32 to vector<2x192xf32>
    %118 = arith.addf %116, %117 : vector<2x192xf32>
    %119 = vector.extract_strided_slice %118 {offsets = [0, 0], sizes = [2, 64], strides = [1, 1]} : vector<2x192xf32> to vector<2x64xf32>
    %120 = vector.extract_strided_slice %118 {offsets = [0, 64], sizes = [2, 64], strides = [1, 1]} : vector<2x192xf32> to vector<2x64xf32>
    %121 = vector.extract_strided_slice %118 {offsets = [0, 128], sizes = [2, 64], strides = [1, 1]} : vector<2x192xf32> to vector<2x64xf32>
    %122 = vector.extract_strided_slice %110 {offsets = [0, 192], sizes = [2, 64], strides = [1, 1]} : vector<2x256xf32> to vector<2x64xf32>
    %123 = math.tanh %122 : vector<2x64xf32>
    %124 = arith.mulf %120, %68 : vector<2x64xf32>
    %125 = arith.mulf %119, %123 : vector<2x64xf32>
    %126 = arith.addf %124, %125 : vector<2x64xf32>
    %127 = math.tanh %126 : vector<2x64xf32>
    %128 = arith.mulf %121, %127 : vector<2x64xf32>
    %cst_59 = arith.constant dense<0.000000e+00> : vector<2x128xf32>
    %129 = tpu.matmul %106, %7, %cst_59 {dimension_numbers = #tpu.dot_dimension_numbers<[1], [0], [0], [1], [0, 0, 1, 1], [], []>} : vector<2x32xf32>, vector<32x128xf32>, vector<2x128xf32> -> vector<2x128xf32>
    %cst_60 = arith.constant dense<0.000000e+00> : vector<2x128xf32>
    %130 = tpu.matmul %128, %8, %cst_60 {dimension_numbers = #tpu.dot_dimension_numbers<[1], [0], [0], [1], [0, 0, 1, 1], [], []>} : vector<2x64xf32>, vector<64x128xf32>, vector<2x128xf32> -> vector<2x128xf32>
    %131 = arith.addf %129, %130 : vector<2x128xf32>
    %132 = vector.broadcast %9 : vector<1x128xf32> to vector<2x128xf32>
    %133 = arith.addf %131, %132 : vector<2x128xf32>
    %c1_61 = arith.constant 1 : index
    %c0_62 = arith.constant 0 : index
    %c0_63 = arith.constant 0 : index
    %134 = vector.load %arg13[%c1_61, %c0_62, %c0_63] : memref<4x2x128xf32, #tpu.memory_space<vmem>>, vector<1x2x128xf32>
    %135 = vector.shape_cast %134 : vector<1x2x128xf32> to vector<2x128xf32>
    %136 = vector.shape_cast %133 : vector<2x128xf32> to vector<1x2x128xf32>
    tpu.vector_store %arg13[%c1_61, %c0_62, %c0_63], %136 {strides = array<i32>} : memref<4x2x128xf32, #tpu.memory_space<vmem>>, vector<1x2x128xf32>,
    %c2 = arith.constant 2 : index
    %c0_64 = arith.constant 0 : index
    %c0_65 = arith.constant 0 : index
    %137 = vector.load %arg0[%c2, %c0_64, %c0_65] : memref<4x2x16xf32, #tpu.memory_space<vmem>>, vector<1x2x16xf32>
    %138 = vector.shape_cast %137 : vector<1x2x16xf32> to vector<2x16xf32>
    %139 = vector.extract_strided_slice %128 {offsets = [0, 0], sizes = [2, 32], strides = [1, 1]} : vector<2x64xf32> to vector<2x32xf32>
    %cst_66 = arith.constant dense<0.000000e+00> : vector<2x32xf32>
    %140 = tpu.matmul %139, %2, %cst_66 {dimension_numbers = #tpu.dot_dimension_numbers<[1], [0], [0], [1], [0, 0, 1, 1], [], []>} : vector<2x32xf32>, vector<32x32xf32>, vector<2x32xf32> -> vector<2x32xf32>
    %141 = vector.broadcast %3 : vector<1x32xf32> to vector<2x32xf32>
    %142 = arith.addf %140, %141 : vector<2x32xf32>
    %143 = vector.shape_cast %142 : vector<2x32xf32> to vector<2x1x32xf32>
    %144 = vector.broadcast %143 : vector<2x1x32xf32> to vector<2x8x32xf32>
    %145 = arith.addf %20, %144 : vector<2x8x32xf32>
    %146 = math.tanh %145 : vector<2x8x32xf32>
    %147 = vector.shape_cast %4 : vector<1x32xf32> to vector<1x1x32xf32>
    %148 = vector.broadcast %147 : vector<1x1x32xf32> to vector<2x8x32xf32>
    %149 = arith.mulf %146, %148 : vector<2x8x32xf32>
    %cst_67 = arith.constant dense<0.000000e+00> : vector<2x8xf32>
    %150 = vector.multi_reduction <add>, %149, %cst_67 [2] : vector<2x8x32xf32> to vector<2x8xf32>
    %151 = vector.shape_cast %150 : vector<2x8xf32> to vector<2x8x1xf32>
    %cst_68 = arith.constant dense<0xFF800000> : vector<2x1xf32>
    %152 = vector.multi_reduction <maximumf>, %151, %cst_68 [1] : vector<2x8x1xf32> to vector<2x1xf32>
    %153 = vector.shape_cast %152 : vector<2x1xf32> to vector<2x1x1xf32>
    %154 = vector.broadcast %153 : vector<2x1x1xf32> to vector<2x8x1xf32>
    %155 = arith.subf %151, %154 : vector<2x8x1xf32>
    %156 = math.exp %155 : vector<2x8x1xf32>
    %cst_69 = arith.constant dense<0.000000e+00> : vector<2x1xf32>
    %157 = vector.multi_reduction <add>, %156, %cst_69 [1] : vector<2x8x1xf32> to vector<2x1xf32>
    %158 = vector.shape_cast %157 : vector<2x1xf32> to vector<2x1x1xf32>
    %159 = vector.broadcast %158 : vector<2x1x1xf32> to vector<2x8x1xf32>
    %160 = arith.divf %156, %159 : vector<2x8x1xf32>
    %161 = vector.broadcast %160 : vector<2x8x1xf32> to vector<2x8x16xf32>
    %162 = arith.mulf %161, %0 : vector<2x8x16xf32>
    %cst_70 = arith.constant dense<0.000000e+00> : vector<2x16xf32>
    %163 = vector.multi_reduction <add>, %162, %cst_70 [1] : vector<2x8x16xf32> to vector<2x16xf32>
    %164 = tpu.concatenate %138, %163 in 1 : vector<2x16xf32>, vector<2x16xf32> -> vector<2x32xf32>
    %165 = tpu.concatenate %164, %128 in 1 : vector<2x32xf32>, vector<2x64xf32> -> vector<2x96xf32>
    %cst_71 = arith.constant dense<0.000000e+00> : vector<2x256xf32>
    %166 = tpu.matmul %165, %5, %cst_71 {dimension_numbers = #tpu.dot_dimension_numbers<[1], [0], [0], [1], [0, 0, 1, 1], [], []>} : vector<2x96xf32>, vector<96x256xf32>, vector<2x256xf32> -> vector<2x256xf32>
    %167 = vector.broadcast %6 : vector<1x256xf32> to vector<2x256xf32>
    %168 = arith.addf %166, %167 : vector<2x256xf32>
    %169 = vector.extract_strided_slice %168 {offsets = [0, 0], sizes = [2, 192], strides = [1, 1]} : vector<2x256xf32> to vector<2x192xf32>
    %cst_72 = arith.constant 5.000000e-01 : f32
    %170 = vector.broadcast %cst_72 : f32 to vector<2x192xf32>
    %171 = arith.mulf %170, %169 : vector<2x192xf32>
    %172 = math.tanh %171 : vector<2x192xf32>
    %cst_73 = arith.constant 5.000000e-01 : f32
    %173 = vector.broadcast %cst_73 : f32 to vector<2x192xf32>
    %174 = arith.mulf %173, %172 : vector<2x192xf32>
    %cst_74 = arith.constant 5.000000e-01 : f32
    %175 = vector.broadcast %cst_74 : f32 to vector<2x192xf32>
    %176 = arith.addf %174, %175 : vector<2x192xf32>
    %177 = vector.extract_strided_slice %176 {offsets = [0, 0], sizes = [2, 64], strides = [1, 1]} : vector<2x192xf32> to vector<2x64xf32>
    %178 = vector.extract_strided_slice %176 {offsets = [0, 64], sizes = [2, 64], strides = [1, 1]} : vector<2x192xf32> to vector<2x64xf32>
    %179 = vector.extract_strided_slice %176 {offsets = [0, 128], sizes = [2, 64], strides = [1, 1]} : vector<2x192xf32> to vector<2x64xf32>
    %180 = vector.extract_strided_slice %168 {offsets = [0, 192], sizes = [2, 64], strides = [1, 1]} : vector<2x256xf32> to vector<2x64xf32>
    %181 = math.tanh %180 : vector<2x64xf32>
    %182 = arith.mulf %178, %126 : vector<2x64xf32>
    %183 = arith.mulf %177, %181 : vector<2x64xf32>
    %184 = arith.addf %182, %183 : vector<2x64xf32>
    %185 = math.tanh %184 : vector<2x64xf32>
    %186 = arith.mulf %179, %185 : vector<2x64xf32>
    %cst_75 = arith.constant dense<0.000000e+00> : vector<2x128xf32>
    %187 = tpu.matmul %164, %7, %cst_75 {dimension_numbers = #tpu.dot_dimension_numbers<[1], [0], [0], [1], [0, 0, 1, 1], [], []>} : vector<2x32xf32>, vector<32x128xf32>, vector<2x128xf32> -> vector<2x128xf32>
    %cst_76 = arith.constant dense<0.000000e+00> : vector<2x128xf32>
    %188 = tpu.matmul %186, %8, %cst_76 {dimension_numbers = #tpu.dot_dimension_numbers<[1], [0], [0], [1], [0, 0, 1, 1], [], []>} : vector<2x64xf32>, vector<64x128xf32>, vector<2x128xf32> -> vector<2x128xf32>
    %189 = arith.addf %187, %188 : vector<2x128xf32>
    %190 = vector.broadcast %9 : vector<1x128xf32> to vector<2x128xf32>
    %191 = arith.addf %189, %190 : vector<2x128xf32>
    %c2_77 = arith.constant 2 : index
    %c0_78 = arith.constant 0 : index
    %c0_79 = arith.constant 0 : index
    %192 = vector.load %arg13[%c2_77, %c0_78, %c0_79] : memref<4x2x128xf32, #tpu.memory_space<vmem>>, vector<1x2x128xf32>
    %193 = vector.shape_cast %192 : vector<1x2x128xf32> to vector<2x128xf32>
    %194 = vector.shape_cast %191 : vector<2x128xf32> to vector<1x2x128xf32>
    tpu.vector_store %arg13[%c2_77, %c0_78, %c0_79], %194 {strides = array<i32>} : memref<4x2x128xf32, #tpu.memory_space<vmem>>, vector<1x2x128xf32>,
    %c3 = arith.constant 3 : index
    %c0_80 = arith.constant 0 : index
    %c0_81 = arith.constant 0 : index
    %195 = vector.load %arg0[%c3, %c0_80, %c0_81] : memref<4x2x16xf32, #tpu.memory_space<vmem>>, vector<1x2x16xf32>
    %196 = vector.shape_cast %195 : vector<1x2x16xf32> to vector<2x16xf32>
    %197 = vector.extract_strided_slice %186 {offsets = [0, 0], sizes = [2, 32], strides = [1, 1]} : vector<2x64xf32> to vector<2x32xf32>
    %cst_82 = arith.constant dense<0.000000e+00> : vector<2x32xf32>
    %198 = tpu.matmul %197, %2, %cst_82 {dimension_numbers = #tpu.dot_dimension_numbers<[1], [0], [0], [1], [0, 0, 1, 1], [], []>} : vector<2x32xf32>, vector<32x32xf32>, vector<2x32xf32> -> vector<2x32xf32>
    %199 = vector.broadcast %3 : vector<1x32xf32> to vector<2x32xf32>
    %200 = arith.addf %198, %199 : vector<2x32xf32>
    %201 = vector.shape_cast %200 : vector<2x32xf32> to vector<2x1x32xf32>
    %202 = vector.broadcast %201 : vector<2x1x32xf32> to vector<2x8x32xf32>
    %203 = arith.addf %20, %202 : vector<2x8x32xf32>
    %204 = math.tanh %203 : vector<2x8x32xf32>
    %205 = vector.shape_cast %4 : vector<1x32xf32> to vector<1x1x32xf32>
    %206 = vector.broadcast %205 : vector<1x1x32xf32> to vector<2x8x32xf32>
    %207 = arith.mulf %204, %206 : vector<2x8x32xf32>
    %cst_83 = arith.constant dense<0.000000e+00> : vector<2x8xf32>
    %208 = vector.multi_reduction <add>, %207, %cst_83 [2] : vector<2x8x32xf32> to vector<2x8xf32>
    %209 = vector.shape_cast %208 : vector<2x8xf32> to vector<2x8x1xf32>
    %cst_84 = arith.constant dense<0xFF800000> : vector<2x1xf32>
    %210 = vector.multi_reduction <maximumf>, %209, %cst_84 [1] : vector<2x8x1xf32> to vector<2x1xf32>
    %211 = vector.shape_cast %210 : vector<2x1xf32> to vector<2x1x1xf32>
    %212 = vector.broadcast %211 : vector<2x1x1xf32> to vector<2x8x1xf32>
    %213 = arith.subf %209, %212 : vector<2x8x1xf32>
    %214 = math.exp %213 : vector<2x8x1xf32>
    %cst_85 = arith.constant dense<0.000000e+00> : vector<2x1xf32>
    %215 = vector.multi_reduction <add>, %214, %cst_85 [1] : vector<2x8x1xf32> to vector<2x1xf32>
    %216 = vector.shape_cast %215 : vector<2x1xf32> to vector<2x1x1xf32>
    %217 = vector.broadcast %216 : vector<2x1x1xf32> to vector<2x8x1xf32>
    %218 = arith.divf %214, %217 : vector<2x8x1xf32>
    %219 = vector.broadcast %218 : vector<2x8x1xf32> to vector<2x8x16xf32>
    %220 = arith.mulf %219, %0 : vector<2x8x16xf32>
    %cst_86 = arith.constant dense<0.000000e+00> : vector<2x16xf32>
    %221 = vector.multi_reduction <add>, %220, %cst_86 [1] : vector<2x8x16xf32> to vector<2x16xf32>
    %222 = tpu.concatenate %196, %221 in 1 : vector<2x16xf32>, vector<2x16xf32> -> vector<2x32xf32>
    %223 = tpu.concatenate %222, %186 in 1 : vector<2x32xf32>, vector<2x64xf32> -> vector<2x96xf32>
    %cst_87 = arith.constant dense<0.000000e+00> : vector<2x256xf32>
    %224 = tpu.matmul %223, %5, %cst_87 {dimension_numbers = #tpu.dot_dimension_numbers<[1], [0], [0], [1], [0, 0, 1, 1], [], []>} : vector<2x96xf32>, vector<96x256xf32>, vector<2x256xf32> -> vector<2x256xf32>
    %225 = vector.broadcast %6 : vector<1x256xf32> to vector<2x256xf32>
    %226 = arith.addf %224, %225 : vector<2x256xf32>
    %227 = vector.extract_strided_slice %226 {offsets = [0, 0], sizes = [2, 192], strides = [1, 1]} : vector<2x256xf32> to vector<2x192xf32>
    %cst_88 = arith.constant 5.000000e-01 : f32
    %228 = vector.broadcast %cst_88 : f32 to vector<2x192xf32>
    %229 = arith.mulf %228, %227 : vector<2x192xf32>
    %230 = math.tanh %229 : vector<2x192xf32>
    %cst_89 = arith.constant 5.000000e-01 : f32
    %231 = vector.broadcast %cst_89 : f32 to vector<2x192xf32>
    %232 = arith.mulf %231, %230 : vector<2x192xf32>
    %cst_90 = arith.constant 5.000000e-01 : f32
    %233 = vector.broadcast %cst_90 : f32 to vector<2x192xf32>
    %234 = arith.addf %232, %233 : vector<2x192xf32>
    %235 = vector.extract_strided_slice %234 {offsets = [0, 0], sizes = [2, 64], strides = [1, 1]} : vector<2x192xf32> to vector<2x64xf32>
    %236 = vector.extract_strided_slice %234 {offsets = [0, 64], sizes = [2, 64], strides = [1, 1]} : vector<2x192xf32> to vector<2x64xf32>
    %237 = vector.extract_strided_slice %234 {offsets = [0, 128], sizes = [2, 64], strides = [1, 1]} : vector<2x192xf32> to vector<2x64xf32>
    %238 = vector.extract_strided_slice %226 {offsets = [0, 192], sizes = [2, 64], strides = [1, 1]} : vector<2x256xf32> to vector<2x64xf32>
    %239 = math.tanh %238 : vector<2x64xf32>
    %240 = arith.mulf %236, %184 : vector<2x64xf32>
    %241 = arith.mulf %235, %239 : vector<2x64xf32>
    %242 = arith.addf %240, %241 : vector<2x64xf32>
    %243 = math.tanh %242 : vector<2x64xf32>
    %244 = arith.mulf %237, %243 : vector<2x64xf32>
    %cst_91 = arith.constant dense<0.000000e+00> : vector<2x128xf32>
    %245 = tpu.matmul %222, %7, %cst_91 {dimension_numbers = #tpu.dot_dimension_numbers<[1], [0], [0], [1], [0, 0, 1, 1], [], []>} : vector<2x32xf32>, vector<32x128xf32>, vector<2x128xf32> -> vector<2x128xf32>
    %cst_92 = arith.constant dense<0.000000e+00> : vector<2x128xf32>
    %246 = tpu.matmul %244, %8, %cst_92 {dimension_numbers = #tpu.dot_dimension_numbers<[1], [0], [0], [1], [0, 0, 1, 1], [], []>} : vector<2x64xf32>, vector<64x128xf32>, vector<2x128xf32> -> vector<2x128xf32>
    %247 = arith.addf %245, %246 : vector<2x128xf32>
    %248 = vector.broadcast %9 : vector<1x128xf32> to vector<2x128xf32>
    %249 = arith.addf %247, %248 : vector<2x128xf32>
    %c3_93 = arith.constant 3 : index
    %c0_94 = arith.constant 0 : index
    %c0_95 = arith.constant 0 : index
    %250 = vector.load %arg13[%c3_93, %c0_94, %c0_95] : memref<4x2x128xf32, #tpu.memory_space<vmem>>, vector<1x2x128xf32>
    %251 = vector.shape_cast %250 : vector<1x2x128xf32> to vector<2x128xf32>
    %252 = vector.shape_cast %249 : vector<2x128xf32> to vector<1x2x128xf32>
    tpu.vector_store %arg13[%c3_93, %c0_94, %c0_95], %252 {strides = array<i32>} : memref<4x2x128xf32, #tpu.memory_space<vmem>>, vector<1x2x128xf32>,
    %c0_96 = arith.constant 0 : index
    %c0_97 = arith.constant 0 : index
    %253 = vector.load %arg14[%c0_96, %c0_97] : memref<2x64xf32, #tpu.memory_space<vmem>>, vector<2x64xf32>
    tpu.vector_store %arg14[%c0_96, %c0_97], %244 {strides = array<i32>} : memref<2x64xf32, #tpu.memory_space<vmem>>, vector<2x64xf32>,
    %c0_98 = arith.constant 0 : index
    %c0_99 = arith.constant 0 : index
    %254 = vector.load %arg15[%c0_98, %c0_99] : memref<2x64xf32, #tpu.memory_space<vmem>>, vector<2x64xf32>
    tpu.vector_store %arg15[%c0_98, %c0_99], %242 {strides = array<i32>} : memref<2x64xf32, #tpu.memory_space<vmem>>, vector<2x64xf32>,
    return
  }
}

</mosaic_0001>

<llo_original>
// kernel: decoder_forward.1
$region0: #{decoder_forward.1}
  #allocation0 [shape = 'u32[]', space=smem, size = 0x4, offset = 0x4, fixed_abs, tag = 'smem constant byte address 0x4 - core index']
  #allocation1 [shape = 'u32[144,128]{1,0:T(1,128)}', space=vmem, size = 0x12000, scoped, tag = 'internal scratch']
  %s0 = inlined_call_operand.vmem [shape: f32[4,2,16], index: 0, kind: input, shape index: {}]
  %s1 = inlined_call_operand.vmem [shape: f32[2,8,16], index: 1, kind: input, shape index: {}]
  %s2 = inlined_call_operand.vmem [shape: f32[2,64], index: 2, kind: input, shape index: {}]
  %s3 = inlined_call_operand.vmem [shape: f32[2,64], index: 3, kind: input, shape index: {}]
  %s4 = inlined_call_operand.vmem [shape: f32[16,32], index: 4, kind: input, shape index: {}]
  %s5 = inlined_call_operand.vmem [shape: f32[32,32], index: 5, kind: input, shape index: {}]
  %s6 = inlined_call_operand.vmem [shape: f32[1,32], index: 6, kind: input, shape index: {}]
  %s7 = inlined_call_operand.vmem [shape: f32[1,32], index: 7, kind: input, shape index: {}]
  %s8 = inlined_call_operand.vmem [shape: f32[96,256], index: 8, kind: input, shape index: {}]
  %s9 = inlined_call_operand.vmem [shape: f32[1,256], index: 9, kind: input, shape index: {}]
  %s10 = inlined_call_operand.vmem [shape: f32[32,128], index: 10, kind: input, shape index: {}]
  %s11 = inlined_call_operand.vmem [shape: f32[64,128], index: 11, kind: input, shape index: {}]
  %s12 = inlined_call_operand.vmem [shape: f32[1,128], index: 12, kind: input, shape index: {}]
  %s13 = inlined_call_operand.hbm [shape: f32[4,2,128], index: 13, kind: output, shape index: {0}]
  %s14 = inlined_call_operand.vmem [shape: f32[2,64], index: 14, kind: output, shape index: {1}]
  %s15 = inlined_call_operand.vmem [shape: f32[2,64], index: 15, kind: output, shape index: {2}]
  %16 = xla_tuple %s13, %s14, %s15
  %s17 = sld [smem:[#allocation0]]
  $region78: #{decoder_forward.1} parent=0
    _
  %s19 = ssub.s32 1, %s17
  %s20 = scalar_select 0, %s19, %s17
  $region1: #{decoder_forward.1} parent=0
    #allocation2 [shape = 'u8[4096]{0}', space=vmem, size = 0x1000, scoped, tag = 'output window, operand 0, single buffered']
    #allocation3 [shape = 's32[1]{0}', space=sflag, size = 0x4, scoped, tag = 'scoped memory for decoder_forward.1']
    %21 = vsyncpa [#allocation3], 0
    // Predicated region
    $region2: #{decoder_forward.1} parent=1 // pred_check
      _
    $region3: #{decoder_forward.1} parent=1 // pred_check_branch
      %23 = sbr.rel (0) target = $region5
    $region4: #{decoder_forward.1} parent=1 // pred_region
      _
    $region5: #{decoder_forward.1} parent=1 // pred_fallthru
      _
    // Predicated region
    $region6: #{decoder_forward.1} parent=1 // pred_check
      _
    $region7: #{decoder_forward.1} parent=1 // pred_check_branch
      %25 = sbr.rel (0) target = $region9
    $region8: #{decoder_forward.1} parent=1 // pred_region
      _
    $region9: #{decoder_forward.1} parent=1 // pred_fallthru
      _
    // Predicated region
    $region10: #{decoder_forward.1} parent=1 // pred_check
      _
    $region11: #{decoder_forward.1} parent=1 // pred_check_branch
      %27 = sbr.rel (0) target = $region13
    $region12: #{decoder_forward.1} parent=1 // pred_region
      _
    $region13: #{decoder_forward.1} parent=1 // pred_fallthru
      _
    // Predicated region
    $region14: #{decoder_forward.1} parent=1 // pred_check
      _
    $region15: #{decoder_forward.1} parent=1 // pred_check_branch
      %29 = sbr.rel (0) target = $region17
    $region16: #{decoder_forward.1} parent=1 // pred_region
      _
    $region17: #{decoder_forward.1} parent=1 // pred_fallthru
      _
    // Predicated region
    $region18: #{decoder_forward.1} parent=1 // pred_check
      _
    $region19: #{decoder_forward.1} parent=1 // pred_check_branch
      %31 = sbr.rel (0) target = $region21
    $region20: #{decoder_forward.1} parent=1 // pred_region
      _
    $region21: #{decoder_forward.1} parent=1 // pred_fallthru
      _
    // Predicated region
    $region22: #{decoder_forward.1} parent=1 // pred_check
      _
    $region23: #{decoder_forward.1} parent=1 // pred_check_branch
      %33 = sbr.rel (0) target = $region25
    $region24: #{decoder_forward.1} parent=1 // pred_region
      _
    $region25: #{decoder_forward.1} parent=1 // pred_fallthru
      _
    // Predicated region
    $region26: #{decoder_forward.1} parent=1 // pred_check
      _
    $region27: #{decoder_forward.1} parent=1 // pred_check_branch
      %35 = sbr.rel (0) target = $region29
    $region28: #{decoder_forward.1} parent=1 // pred_region
      _
    $region29: #{decoder_forward.1} parent=1 // pred_fallthru
      _
    // Predicated region
    $region30: #{decoder_forward.1} parent=1 // pred_check
      _
    $region31: #{decoder_forward.1} parent=1 // pred_check_branch
      %37 = sbr.rel (0) target = $region33
    $region32: #{decoder_forward.1} parent=1 // pred_region
      _
    $region33: #{decoder_forward.1} parent=1 // pred_fallthru
      _
    // Predicated region
    $region34: #{decoder_forward.1} parent=1 // pred_check
      _
    $region35: #{decoder_forward.1} parent=1 // pred_check_branch
      %39 = sbr.rel (0) target = $region37
    $region36: #{decoder_forward.1} parent=1 // pred_region
      _
    $region37: #{decoder_forward.1} parent=1 // pred_fallthru
      _
    // Predicated region
    $region38: #{decoder_forward.1} parent=1 // pred_check
      _
    $region39: #{decoder_forward.1} parent=1 // pred_check_branch
      %41 = sbr.rel (0) target = $region41
    $region40: #{decoder_forward.1} parent=1 // pred_region
      _
    $region41: #{decoder_forward.1} parent=1 // pred_fallthru
      _
    // Predicated region
    $region42: #{decoder_forward.1} parent=1 // pred_check
      _
    $region43: #{decoder_forward.1} parent=1 // pred_check_branch
      %43 = sbr.rel (0) target = $region45
    $region44: #{decoder_forward.1} parent=1 // pred_region
      _
    $region45: #{decoder_forward.1} parent=1 // pred_fallthru
      _
    // Predicated region
    $region46: #{decoder_forward.1} parent=1 // pred_check
      _
    $region47: #{decoder_forward.1} parent=1 // pred_check_branch
      %45 = sbr.rel (0) target = $region49
    $region48: #{decoder_forward.1} parent=1 // pred_region
      _
    $region49: #{decoder_forward.1} parent=1 // pred_fallthru
      _
    // Predicated region
    $region50: #{decoder_forward.1} parent=1 // pred_check
      _
    $region51: #{decoder_forward.1} parent=1 // pred_check_branch
      %47 = sbr.rel (0) target = $region53
    $region52: #{decoder_forward.1} parent=1 // pred_region
      _
    $region53: #{decoder_forward.1} parent=1 // pred_fallthru
      _
    %v48 = vld [vmem:[%s1] sm:$0xff]
    %v49 = vld [vmem:[%s1 + $0x8] sm:$0xff]
    %v50 = vld [vmem:[%s4] sm:$0xff]
    %v51 = vld [vmem:[%s4 + $0x8] sm:$0xff]
    %v52 = vld [vmem:[%s5] sm:$0xff]
    %v53 = vld [vmem:[%s5 + $0x8] sm:$0xff]
    %v54 = vld [vmem:[%s5 + $0x10] sm:$0xff]
    %v55 = vld [vmem:[%s5 + $0x18] sm:$0xff]
    %v56 = vld [vmem:[%s6] sm:$0x1]
    %v57 = vld [vmem:[%s7] sm:$0x1]
    %v58 = vld [vmem:[%s8] sm:$0xff]
    %v59 = vld [vmem:[%s8 + $0x8] sm:$0xff]
    %v60 = vld [vmem:[%s8 + $0x10] sm:$0xff]
    %v61 = vld [vmem:[%s8 + $0x18] sm:$0xff]
    %v62 = vld [vmem:[%s8 + $0x20] sm:$0xff]
    %v63 = vld [vmem:[%s8 + $0x28] sm:$0xff]
    %v64 = vld [vmem:[%s8 + $0x30] sm:$0xff]
    %v65 = vld [vmem:[%s8 + $0x38] sm:$0xff]
    %v66 = vld [vmem:[%s8 + $0x40] sm:$0xff]
    %v67 = vld [vmem:[%s8 + $0x48] sm:$0xff]
    %v68 = vld [vmem:[%s8 + $0x50] sm:$0xff]
    %v69 = vld [vmem:[%s8 + $0x58] sm:$0xff]
    %v70 = vld [vmem:[%s8 + $0x60] sm:$0xff]
    %v71 = vld [vmem:[%s8 + $0x68] sm:$0xff]
    %v72 = vld [vmem:[%s8 + $0x70] sm:$0xff]
    %v73 = vld [vmem:[%s8 + $0x78] sm:$0xff]
    %v74 = vld [vmem:[%s8 + $0x80] sm:$0xff]
    %v75 = vld [vmem:[%s8 + $0x88] sm:$0xff]
    %v76 = vld [vmem:[%s8 + $0x90] sm:$0xff]
    %v77 = vld [vmem:[%s8 + $0x98] sm:$0xff]
    %v78 = vld [vmem:[%s8 + $0xa0] sm:$0xff]
    %v79 = vld [vmem:[%s8 + $0xa8] sm:$0xff]
    %v80 = vld [vmem:[%s8 + $0xb0] sm:$0xff]
    %v81 = vld [vmem:[%s8 + $0xb8] sm:$0xff]
    %v82 = vld [vmem:[%s9] sm:$0x3]
    %v83 = vld [vmem:[%s10] sm:$0xff]
    %v84 = vld [vmem:[%s10 + $0x8] sm:$0xff]
    %v85 = vld [vmem:[%s10 + $0x10] sm:$0xff]
    %v86 = vld [vmem:[%s10 + $0x18] sm:$0xff]
    %v87 = vld [vmem:[%s11] sm:$0xff]
    %v88 = vld [vmem:[%s11 + $0x8] sm:$0xff]
    %v89 = vld [vmem:[%s11 + $0x10] sm:$0xff]
    %v90 = vld [vmem:[%s11 + $0x18] sm:$0xff]
    %v91 = vld [vmem:[%s11 + $0x20] sm:$0xff]
    %v92 = vld [vmem:[%s11 + $0x28] sm:$0xff]
    %v93 = vld [vmem:[%s11 + $0x30] sm:$0xff]
    %v94 = vld [vmem:[%s11 + $0x38] sm:$0xff]
    %v95 = vld [vmem:[%s12] sm:$0x1]
    %v96 = vld [vmem:[%s2] sm:$0x3]
    %v97 = vld [vmem:[%s3] sm:$0x3]
    %vm98 = vcmask 130048
    %v100 = vsel %vm98, %v48, 0
    %102 = vmatprep.subr.mxu0 0.0
    %103 = vmatpush1.msra.mxu0 %v50
    %104 = vmatprep.subr.mxu0 0.0
    %105 = vmatpush1.msra.mxu0 %v51
    %106 = vmatprep.subr.mxu0 0.0
    %107 = vmatpush1.msra.mxu0 0.0
    %108 = vmatprep.subr.mxu0 0.0
    %109 = vmatpush1.msra.mxu0 0.0
    %110 = vmatprep.subr.mxu0 0.0
    %111 = vmatpush1.msra.mxu0 0.0
    %112 = vmatprep.subr.mxu0 0.0
    %113 = vmatpush1.msra.mxu0 0.0
    %114 = vmatprep.subr.mxu0 0.0
    %115 = vmatpush1.msra.mxu0 0.0
    %116 = vmatprep.subr.mxu0 0.0
    %117 = vmatpush1.msra.mxu0 0.0
    %118 = vmatprep.subr.mxu0 0.0
    %119 = vmatpush1.msra.mxu0 0.0
    %120 = vmatprep.subr.mxu0 0.0
    %121 = vmatpush1.msra.mxu0 0.0
    %122 = vmatprep.subr.mxu0 0.0
    %123 = vmatpush1.msra.mxu0 0.0
    %124 = vmatprep.subr.mxu0 0.0
    %125 = vmatpush1.msra.mxu0 0.0
    %126 = vmatprep.subr.mxu0 0.0
    %127 = vmatpush1.msra.mxu0 0.0
    %128 = vmatprep.subr.mxu0 0.0
    %129 = vmatpush1.msra.mxu0 0.0
    %130 = vmatprep.subr.mxu0 0.0
    %131 = vmatpush1.msra.mxu0 0.0
    %132 = vmatprep.subr.mxu0 0.0
    %133 = vmatpush1.msra.mxu0 0.0
    %134 = vmatprep.subr.mxu0 0.0
    %135 = vmatpush1.msra.mxu0 0.0
    %136 = vmatprep.subr.mxu0 0.0
    %137 = vmatpush1.msra.mxu0 0.0
    %138 = vmatprep.subr.mxu0 0.0
    %139 = vmatpush1.msra.mxu0 0.0
    %140 = vmatprep.subr.mxu0 0.0
    %141 = vmatpush1.msra.mxu0 0.0
    %142 = vmatprep.subr.mxu0 0.0
    %143 = vmatpush1.msra.mxu0 0.0
    %144 = vmatprep.subr.mxu0 0.0
    %145 = vmatpush1.msra.mxu0 0.0
    %146 = vmatprep.subr.mxu0 0.0
    %147 = vmatpush1.msra.mxu0 0.0
    %148 = vmatprep.subr.mxu0 0.0
    %149 = vmatpush1.msra.mxu0 0.0
    %150 = vmatprep.subr.mxu0 0.0
    %151 = vmatpush1.msra.mxu0 0.0
    %152 = vmatprep.subr.mxu0 0.0
    %153 = vmatpush1.msra.mxu0 0.0
    %154 = vmatprep.subr.mxu0 0.0
    %155 = vmatpush1.msra.mxu0 0.0
    %156 = vmatprep.subr.mxu0 0.0
    %157 = vmatpush1.msra.mxu0 0.0
    %158 = vmatprep.subr.mxu0 0.0
    %159 = vmatpush1.msra.mxu0 0.0
    %160 = vmatprep.subr.mxu0 0.0
    %161 = vmatpush1.msra.mxu0 0.0
    %162 = vmatprep.subr.mxu0 0.0
    %163 = vmatpush1.msra.mxu0 0.0
    %164 = vmatprep.subr.mxu0 0.0
    %165 = vmatpush1.msra.mxu0 0.0
    %166 = vmatprep.mubr.f32.mxu0 0.0
    %167 = vmatmul.mubr.f32.gmra.mrb[0].mxu0 %v100
    %v168 = vpop.f32.mrb[0].mxu0
    %v169 = vadd.f32 0.0, %v168
    %v170 = vpop.f32.mrb[0].mxu0
    %171 = vdwg.mxu0
    %s172 = scalar_lea.vmem %s1, 8
    %v173 = vld [vmem:[%s172] sm:$0xff]
    %v175 = vsel %vm98, %v173, 0
    %177 = vmatprep.subr.mxu0 0.0
    %178 = vmatpush1.msra.mxu0 %v50
    %179 = vmatprep.subr.mxu0 0.0
    %180 = vmatpush1.msra.mxu0 %v51
    %181 = vmatprep.subr.mxu0 0.0
    %182 = vmatpush1.msra.mxu0 0.0
    %183 = vmatprep.subr.mxu0 0.0
    %184 = vmatpush1.msra.mxu0 0.0
    %185 = vmatprep.subr.mxu0 0.0
    %186 = vmatpush1.msra.mxu0 0.0
    %187 = vmatprep.subr.mxu0 0.0
    %188 = vmatpush1.msra.mxu0 0.0
    %189 = vmatprep.subr.mxu0 0.0
    %190 = vmatpush1.msra.mxu0 0.0
    %191 = vmatprep.subr.mxu0 0.0
    %192 = vmatpush1.msra.mxu0 0.0
    %193 = vmatprep.subr.mxu0 0.0
    %194 = vmatpush1.msra.mxu0 0.0
    %195 = vmatprep.subr.mxu0 0.0
    %196 = vmatpush1.msra.mxu0 0.0
    %197 = vmatprep.subr.mxu0 0.0
    %198 = vmatpush1.msra.mxu0 0.0
    %199 = vmatprep.subr.mxu0 0.0
    %200 = vmatpush1.msra.mxu0 0.0
    %201 = vmatprep.subr.mxu0 0.0
    %202 = vmatpush1.msra.mxu0 0.0
    %203 = vmatprep.subr.mxu0 0.0
    %204 = vmatpush1.msra.mxu0 0.0
    %205 = vmatprep.subr.mxu0 0.0
    %206 = vmatpush1.msra.mxu0 0.0
    %207 = vmatprep.subr.mxu0 0.0
    %208 = vmatpush1.msra.mxu0 0.0
    %209 = vmatprep.subr.mxu0 0.0
    %210 = vmatpush1.msra.mxu0 0.0
    %211 = vmatprep.subr.mxu0 0.0
    %212 = vmatpush1.msra.mxu0 0.0
    %213 = vmatprep.subr.mxu0 0.0
    %214 = vmatpush1.msra.mxu0 0.0
    %215 = vmatprep.subr.mxu0 0.0
    %216 = vmatpush1.msra.mxu0 0.0
    %217 = vmatprep.subr.mxu0 0.0
    %218 = vmatpush1.msra.mxu0 0.0
    %219 = vmatprep.subr.mxu0 0.0
    %220 = vmatpush1.msra.mxu0 0.0
    %221 = vmatprep.subr.mxu0 0.0
    %222 = vmatpush1.msra.mxu0 0.0
    %223 = vmatprep.subr.mxu0 0.0
    %224 = vmatpush1.msra.mxu0 0.0
    %225 = vmatprep.subr.mxu0 0.0
    %226 = vmatpush1.msra.mxu0 0.0
    %227 = vmatprep.subr.mxu0 0.0
    %228 = vmatpush1.msra.mxu0 0.0
    %229 = vmatprep.subr.mxu0 0.0
    %230 = vmatpush1.msra.mxu0 0.0
    %231 = vmatprep.subr.mxu0 0.0
    %232 = vmatpush1.msra.mxu0 0.0
    %233 = vmatprep.subr.mxu0 0.0
    %234 = vmatpush1.msra.mxu0 0.0
    %235 = vmatprep.subr.mxu0 0.0
    %236 = vmatpush1.msra.mxu0 0.0
    %237 = vmatprep.subr.mxu0 0.0
    %238 = vmatpush1.msra.mxu0 0.0
    %239 = vmatprep.subr.mxu0 0.0
    %240 = vmatpush1.msra.mxu0 0.0
    %241 = vmatprep.mubr.f32.mxu0 0.0
    %242 = vmatmul.mubr.f32.gmra.mrb[0].mxu0 %v175
    %v243 = vpop.f32.mrb[0].mxu0
    %v244 = vadd.f32 0.0, %v243
    %v245 = vpop.f32.mrb[0].mxu0
    %246 = vdwg.mxu0
    %v247 = vld [vmem:[%s0] sm:$0x3]
    %v249 = vlaneseq
    %v250 = vshrl.u32 %v249, 7
    %v251 = vsub.s32 0, %v250
    %v252 = vrot.slane %v56, %v251
    %vm254 = vcmask 261120
    %v256 = vsel %vm254, %v96, 0
    %258 = vmatprep.subr.mxu0 0.0
    %259 = vmatpush1.msra.mxu0 %v52
    %260 = vmatprep.subr.mxu0 0.0
    %261 = vmatpush1.msra.mxu0 %v53
    %262 = vmatprep.subr.mxu0 0.0
    %263 = vmatpush1.msra.mxu0 %v54
    %264 = vmatprep.subr.mxu0 0.0
    %265 = vmatpush1.msra.mxu0 %v55
    %266 = vmatprep.subr.mxu0 0.0
    %267 = vmatpush1.msra.mxu0 0.0
    %268 = vmatprep.subr.mxu0 0.0
    %269 = vmatpush1.msra.mxu0 0.0
    %270 = vmatprep.subr.mxu0 0.0
    %271 = vmatpush1.msra.mxu0 0.0
    %272 = vmatprep.subr.mxu0 0.0
    %273 = vmatpush1.msra.mxu0 0.0
    %274 = vmatprep.subr.mxu0 0.0
    %275 = vmatpush1.msra.mxu0 0.0
    %276 = vmatprep.subr.mxu0 0.0
    %277 = vmatpush1.msra.mxu0 0.0
    %278 = vmatprep.subr.mxu0 0.0
    %279 = vmatpush1.msra.mxu0 0.0
    %280 = vmatprep.subr.mxu0 0.0
    %281 = vmatpush1.msra.mxu0 0.0
    %282 = vmatprep.subr.mxu0 0.0
    %283 = vmatpush1.msra.mxu0 0.0
    %284 = vmatprep.subr.mxu0 0.0
    %285 = vmatpush1.msra.mxu0 0.0
    %286 = vmatprep.subr.mxu0 0.0
    %287 = vmatpush1.msra.mxu0 0.0
    %288 = vmatprep.subr.mxu0 0.0
    %289 = vmatpush1.msra.mxu0 0.0
    %290 = vmatprep.subr.mxu0 0.0
    %291 = vmatpush1.msra.mxu0 0.0
    %292 = vmatprep.subr.mxu0 0.0
    %293 = vmatpush1.msra.mxu0 0.0
    %294 = vmatprep.subr.mxu0 0.0
    %295 = vmatpush1.msra.mxu0 0.0
    %296 = vmatprep.subr.mxu0 0.0
    %297 = vmatpush1.msra.mxu0 0.0
    %298 = vmatprep.subr.mxu0 0.0
    %299 = vmatpush1.msra.mxu0 0.0
    %300 = vmatprep.subr.mxu0 0.0
    %301 = vmatpush1.msra.mxu0 0.0
    %302 = vmatprep.subr.mxu0 0.0
    %303 = vmatpush1.msra.mxu0 0.0
    %304 = vmatprep.subr.mxu0 0.0
    %305 = vmatpush1.msra.mxu0 0.0
    %306 = vmatprep.subr.mxu0 0.0
    %307 = vmatpush1.msra.mxu0 0.0
    %308 = vmatprep.subr.mxu0 0.0
    %309 = vmatpush1.msra.mxu0 0.0
    %310 = vmatprep.subr.mxu0 0.0
    %311 = vmatpush1.msra.mxu0 0.0
    %312 = vmatprep.subr.mxu0 0.0
    %313 = vmatpush1.msra.mxu0 0.0
    %314 = vmatprep.subr.mxu0 0.0
    %315 = vmatpush1.msra.mxu0 0.0
    %316 = vmatprep.subr.mxu0 0.0
    %317 = vmatpush1.msra.mxu0 0.0
    %318 = vmatprep.subr.mxu0 0.0
    %319 = vmatpush1.msra.mxu0 0.0
    %320 = vmatprep.subr.mxu0 0.0
    %321 = vmatpush1.msra.mxu0 0.0
    %322 = vmatprep.mubr.f32.mxu0 0.0
    %323 = vmatmul.mubr.f32.gmra.mrb[0].mxu0 %v256
    %v324 = vpop.f32.mrb[0].mxu0
    %v325 = vadd.f32 %v252, %v324
    %v326 = vpop.f32.mrb[0].mxu0
    %327 = vdwg.mxu0
    %v330 = vunpack.c.l.s4 1966171168
    %v331 = vunpack.c.0.s8 %v330
    %v332 = vlaneseq
    %v333 = vshrl.u32 %v332, 7
    %v334 = vsub.s32 %v331, %v333
    %v335 = vrot.slane %v325, %v334
    %v336 = vcombine.high %v335, %v335
    %v338 = vunpack.c.l.s4 1966171168
    %v339 = vunpack.c.0.s8 %v338
    %v340 = vlaneseq
    %v341 = vshrl.u32 %v340, 7
    %v342 = vsub.s32 %v339, %v341
    %v343 = vrot.slane %v335, %v342
    %v345 = vunpack.c.l.s4 1966171168
    %v346 = vunpack.c.0.s8 %v345
    %v347 = vlaneseq
    %v348 = vshrl.u32 %v347, 7
    %v349 = vsub.s32 %v346, %v348
    %v350 = vrot.slane %v336, %v349
    %v351 = vlaneseq
    %v352 = vshrl.u32 %v351, 7
    %v353 = vsub.s32 0, %v352
    %v354 = vrot.slane %v343, %v353
    %v355 = vlaneseq
    %v356 = vshrl.u32 %v355, 7
    %v357 = vsub.s32 0, %v356
    %v358 = vrot.slane %v350, %v357
    %v361 = vadd.f32 %v169, %v354
    %v362 = vadd.f32 %v244, %v358
    %v363 = vtanh.pop %v361
    %v364 = vtanh.pop %v362
    %v366 = vlaneseq
    %v367 = vshrl.u32 %v366, 7
    %v368 = vsub.s32 0, %v367
    %v369 = vrot.slane %v57, %v368
    %v371 = vmul.f32 %v363, %v369
    %v372 = vmul.f32 %v364, %v369
    %v373 = vsel %vm254, %v371, 0.0
    %374 = vadd.xlane.f32.xlu0 %v373
    %v375 = vpop.xlane.xlu0 %374
    %v376 = vsel %vm254, %v372, 0.0
    %377 = vadd.xlane.f32.xlu0 %v376
    %v378 = vpop.xlane.xlu0 %377
    %v379 = vrot.slane %v375, 4
    %v380 = vmax.f32 %v375, %v379
    %v381 = vrot.slane %v380, 2
    %v382 = vmax.f32 %v380, %v381
    %v383 = vrot.slane %v382, 1
    %v384 = vmax.f32 %v382, %v383
    %v385 = vrot.slane %v378, 4
    %v386 = vmax.f32 %v378, %v385
    %v387 = vrot.slane %v386, 2
    %v388 = vmax.f32 %v386, %v387
    %v389 = vrot.slane %v388, 1
    %v390 = vmax.f32 %v388, %v389
    %v391 = vsub.f32 %v375, %v384
    %v392 = vsub.f32 %v378, %v390
    %v393 = vmul.f32 %v391, 1.442695
    %v394 = vpow.pop %v393
    %v395 = vmul.f32 %v392, 1.442695
    %v396 = vpow.pop %v395
    %v397 = vrot.slane %v394, 4
    %v398 = vadd.f32 %v394, %v397
    %v399 = vrot.slane %v398, 2
    %v400 = vadd.f32 %v398, %v399
    %v401 = vrot.slane %v400, 1
    %v402 = vadd.f32 %v400, %v401
    %v403 = vrot.slane %v396, 4
    %v404 = vadd.f32 %v396, %v403
    %v405 = vrot.slane %v404, 2
    %v406 = vadd.f32 %v404, %v405
    %v407 = vrot.slane %v406, 1
    %v408 = vadd.f32 %v406, %v407
    %v409 = vrcp.pop %v402
    %v410 = vmul.f32 %v394, %v409
    %v411 = vrcp.pop %v408
    %v412 = vmul.f32 %v396, %v411
    %v413 = vmul.f32 %v410, %v48
    %v414 = vmul.f32 %v412, %v49
    %v415 = vsel %vm98, %v413, 0.0
    %v416 = vrot.slane %v415, 4
    %v417 = vadd.f32 %v415, %v416
    %v418 = vrot.slane %v417, 2
    %v419 = vadd.f32 %v417, %v418
    %v420 = vrot.slane %v419, 1
    %v421 = vadd.f32 %v419, %v420
    %v422 = vsel %vm98, %v414, 0.0
    %v423 = vrot.slane %v422, 4
    %v424 = vadd.f32 %v422, %v423
    %v425 = vrot.slane %v424, 2
    %v426 = vadd.f32 %v424, %v425
    %v427 = vrot.slane %v426, 1
    %v428 = vadd.f32 %v426, %v427
    %vm431 = vcmask 1041409
    %v432 = vsel %vm431, %v428, %v421
    %433 = vrot.lane.b32.xlu0 %v432, 16
    %v434 = vpop.permute.xlu0 %433
    %v436 = vsel %vm98, %v247, %v434
    %437 = vrot.lane.b32.xlu0 %v96, 32
    %v438 = vpop.permute.xlu0 %437
    %v440 = vsel %vm254, %v436, %v438
    %v442 = vlaneseq
    %v443 = vshrl.u32 %v442, 7
    %v444 = vsub.s32 0, %v443
    %v445 = vrot.slane %v82, %v444
    %v446 = vlaneseq
    %v447 = vshrl.u32 %v446, 7
    %v448 = vsub.s32 1, %v447
    %v449 = vrot.slane %v82, %v448
    %vm452 = vcmask 785408
    %v454 = vsel %vm452, %v440, 0
    %456 = vmatprep.subr.mxu0 %v59
    %457 = vmatpush1.msra.mxu0 %v58
    %458 = vmatprep.subr.mxu0 %v61
    %459 = vmatpush1.msra.mxu0 %v60
    %460 = vmatprep.subr.mxu0 %v63
    %461 = vmatpush1.msra.mxu0 %v62
    %462 = vmatprep.subr.mxu0 %v65
    %463 = vmatpush1.msra.mxu0 %v64
    %464 = vmatprep.subr.mxu0 %v67
    %465 = vmatpush1.msra.mxu0 %v66
    %466 = vmatprep.subr.mxu0 %v69
    %467 = vmatpush1.msra.mxu0 %v68
    %468 = vmatprep.subr.mxu0 %v71
    %469 = vmatpush1.msra.mxu0 %v70
    %470 = vmatprep.subr.mxu0 %v73
    %471 = vmatpush1.msra.mxu0 %v72
    %472 = vmatprep.subr.mxu0 %v75
    %473 = vmatpush1.msra.mxu0 %v74
    %474 = vmatprep.subr.mxu0 %v77
    %475 = vmatpush1.msra.mxu0 %v76
    %476 = vmatprep.subr.mxu0 %v79
    %477 = vmatpush1.msra.mxu0 %v78
    %478 = vmatprep.subr.mxu0 %v81
    %479 = vmatpush1.msra.mxu0 %v80
    %480 = vmatprep.subr.mxu0 0.0
    %481 = vmatpush1.msra.mxu0 0.0
    %482 = vmatprep.subr.mxu0 0.0
    %483 = vmatpush1.msra.mxu0 0.0
    %484 = vmatprep.subr.mxu0 0.0
    %485 = vmatpush1.msra.mxu0 0.0
    %486 = vmatprep.subr.mxu0 0.0
    %487 = vmatpush1.msra.mxu0 0.0
    %488 = vmatprep.subr.mxu0 0.0
    %489 = vmatpush1.msra.mxu0 0.0
    %490 = vmatprep.subr.mxu0 0.0
    %491 = vmatpush1.msra.mxu0 0.0
    %492 = vmatprep.subr.mxu0 0.0
    %493 = vmatpush1.msra.mxu0 0.0
    %494 = vmatprep.subr.mxu0 0.0
    %495 = vmatpush1.msra.mxu0 0.0
    %496 = vmatprep.subr.mxu0 0.0
    %497 = vmatpush1.msra.mxu0 0.0
    %498 = vmatprep.subr.mxu0 0.0
    %499 = vmatpush1.msra.mxu0 0.0
    %500 = vmatprep.subr.mxu0 0.0
    %501 = vmatpush1.msra.mxu0 0.0
    %502 = vmatprep.subr.mxu0 0.0
    %503 = vmatpush1.msra.mxu0 0.0
    %504 = vmatprep.subr.mxu0 0.0
    %505 = vmatpush1.msra.mxu0 0.0
    %506 = vmatprep.subr.mxu0 0.0
    %507 = vmatpush1.msra.mxu0 0.0
    %508 = vmatprep.subr.mxu0 0.0
    %509 = vmatpush1.msra.mxu0 0.0
    %510 = vmatprep.subr.mxu0 0.0
    %511 = vmatpush1.msra.mxu0 0.0
    %512 = vmatprep.subr.mxu0 0.0
    %513 = vmatpush1.msra.mxu0 0.0
    %514 = vmatprep.subr.mxu0 0.0
    %515 = vmatpush1.msra.mxu0 0.0
    %516 = vmatprep.subr.mxu0 0.0
    %517 = vmatpush1.msra.mxu0 0.0
    %518 = vmatprep.subr.mxu0 0.0
    %519 = vmatpush1.msra.mxu0 0.0
    %520 = vmatprep.mubr.f32.mxu0 0.0
    %521 = vmatmul.mubr.f32.gmra.mrb[0].mxu0 %v454
    %v522 = vpop.f32.mrb[0].mxu0
    %v523 = vadd.f32 %v445, %v522
    %v524 = vpop.f32.mrb[0].mxu0
    %v525 = vadd.f32 %v449, %v524
    %526 = vdwg.mxu0
    %v527 = vmul.f32 %v523, 0.5
    %v528 = vmul.f32 %v525, 0.5
    %v529 = vtanh.pop %v527
    %v530 = vtanh.pop %v528
    %v531 = vmul.f32 %v529, 0.5
    %v532 = vmul.f32 %v530, 0.5
    %v533 = vadd.f32 %v531, 0.5
    %v534 = vadd.f32 %v532, 0.5
    %v535 = vtanh.pop %v525
    %537 = vrot.lane.b32.xlu0 %v97, 64
    %v538 = vpop.permute.xlu0 %537
    %v540 = vmul.f32 %v533, %v538
    %542 = vrot.lane.b32.xlu0 %v535, 64
    %v543 = vpop.permute.xlu0 %542
    %v545 = vmul.f32 %v533, %v543
    %547 = vrot.lane.b32.xlu0 %v545, 64
    %v548 = vpop.permute.xlu0 %547
    %v550 = vadd.f32 %v540, %v548
    %v551 = vtanh.pop %v550
    %553 = vrot.lane.b32.xlu0 %v551, 64
    %v554 = vpop.permute.xlu0 %553
    %v556 = vmul.f32 %v534, %v554
    %vm557 = vcmask 523264
    %v559 = vsel %vm557, %v556, 0
    %561 = vmatprep.subr.mxu0 0.0
    %562 = vmatpush1.msra.mxu0 %v87
    %563 = vmatprep.subr.mxu0 0.0
    %564 = vmatpush1.msra.mxu0 %v88
    %565 = vmatprep.subr.mxu0 0.0
    %566 = vmatpush1.msra.mxu0 %v89
    %567 = vmatprep.subr.mxu0 0.0
    %568 = vmatpush1.msra.mxu0 %v90
    %569 = vmatprep.subr.mxu0 0.0
    %570 = vmatpush1.msra.mxu0 %v91
    %571 = vmatprep.subr.mxu0 0.0
    %572 = vmatpush1.msra.mxu0 %v92
    %573 = vmatprep.subr.mxu0 0.0
    %574 = vmatpush1.msra.mxu0 %v93
    %575 = vmatprep.subr.mxu0 0.0
    %576 = vmatpush1.msra.mxu0 %v94
    %577 = vmatprep.subr.mxu0 0.0
    %578 = vmatpush1.msra.mxu0 0.0
    %579 = vmatprep.subr.mxu0 0.0
    %580 = vmatpush1.msra.mxu0 0.0
    %581 = vmatprep.subr.mxu0 0.0
    %582 = vmatpush1.msra.mxu0 0.0
    %583 = vmatprep.subr.mxu0 0.0
    %584 = vmatpush1.msra.mxu0 0.0
    %585 = vmatprep.subr.mxu0 0.0
    %586 = vmatpush1.msra.mxu0 0.0
    %587 = vmatprep.subr.mxu0 0.0
    %588 = vmatpush1.msra.mxu0 0.0
    %589 = vmatprep.subr.mxu0 0.0
    %590 = vmatpush1.msra.mxu0 0.0
    %591 = vmatprep.subr.mxu0 0.0
    %592 = vmatpush1.msra.mxu0 0.0
    %593 = vmatprep.subr.mxu0 0.0
    %594 = vmatpush1.msra.mxu0 0.0
    %595 = vmatprep.subr.mxu0 0.0
    %596 = vmatpush1.msra.mxu0 0.0
    %597 = vmatprep.subr.mxu0 0.0
    %598 = vmatpush1.msra.mxu0 0.0
    %599 = vmatprep.subr.mxu0 0.0
    %600 = vmatpush1.msra.mxu0 0.0
    %601 = vmatprep.subr.mxu0 0.0
    %602 = vmatpush1.msra.mxu0 0.0
    %603 = vmatprep.subr.mxu0 0.0
    %604 = vmatpush1.msra.mxu0 0.0
    %605 = vmatprep.subr.mxu0 0.0
    %606 = vmatpush1.msra.mxu0 0.0
    %607 = vmatprep.subr.mxu0 0.0
    %608 = vmatpush1.msra.mxu0 0.0
    %609 = vmatprep.subr.mxu0 0.0
    %610 = vmatpush1.msra.mxu0 0.0
    %611 = vmatprep.subr.mxu0 0.0
    %612 = vmatpush1.msra.mxu0 0.0
    %613 = vmatprep.subr.mxu0 0.0
    %614 = vmatpush1.msra.mxu0 0.0
    %615 = vmatprep.subr.mxu0 0.0
    %616 = vmatpush1.msra.mxu0 0.0
    %617 = vmatprep.subr.mxu0 0.0
    %618 = vmatpush1.msra.mxu0 0.0
    %619 = vmatprep.subr.mxu0 0.0
    %620 = vmatpush1.msra.mxu0 0.0
    %621 = vmatprep.subr.mxu0 0.0
    %622 = vmatpush1.msra.mxu0 0.0
    %623 = vmatprep.subr.mxu0 0.0
    %624 = vmatpush1.msra.mxu0 0.0
    %625 = vmatprep.mubr.f32.mxu0 0.0
    %626 = vmatmul.mubr.f32.gmra.mrb[0].mxu0 %v559
    %v627 = vpop.f32.mrb[0].mxu0
    %v628 = vadd.f32 0.0, %v627
    %v629 = vpop.f32.mrb[0].mxu0
    %630 = vdwg.mxu0
    %v632 = vsel %vm254, %v436, 0
    %634 = vmatprep.subr.mxu0 0.0
    %635 = vmatpush1.msra.mxu0 %v83
    %636 = vmatprep.subr.mxu0 0.0
    %637 = vmatpush1.msra.mxu0 %v84
    %638 = vmatprep.subr.mxu0 0.0
    %639 = vmatpush1.msra.mxu0 %v85
    %640 = vmatprep.subr.mxu0 0.0
    %641 = vmatpush1.msra.mxu0 %v86
    %642 = vmatprep.subr.mxu0 0.0
    %643 = vmatpush1.msra.mxu0 0.0
    %644 = vmatprep.subr.mxu0 0.0
    %645 = vmatpush1.msra.mxu0 0.0
    %646 = vmatprep.subr.mxu0 0.0
    %647 = vmatpush1.msra.mxu0 0.0
    %648 = vmatprep.subr.mxu0 0.0
    %649 = vmatpush1.msra.mxu0 0.0
    %650 = vmatprep.subr.mxu0 0.0
    %651 = vmatpush1.msra.mxu0 0.0
    %652 = vmatprep.subr.mxu0 0.0
    %653 = vmatpush1.msra.mxu0 0.0
    %654 = vmatprep.subr.mxu0 0.0
    %655 = vmatpush1.msra.mxu0 0.0
    %656 = vmatprep.subr.mxu0 0.0
    %657 = vmatpush1.msra.mxu0 0.0
    %658 = vmatprep.subr.mxu0 0.0
    %659 = vmatpush1.msra.mxu0 0.0
    %660 = vmatprep.subr.mxu0 0.0
    %661 = vmatpush1.msra.mxu0 0.0
    %662 = vmatprep.subr.mxu0 0.0
    %663 = vmatpush1.msra.mxu0 0.0
    %664 = vmatprep.subr.mxu0 0.0
    %665 = vmatpush1.msra.mxu0 0.0
    %666 = vmatprep.subr.mxu0 0.0
    %667 = vmatpush1.msra.mxu0 0.0
    %668 = vmatprep.subr.mxu0 0.0
    %669 = vmatpush1.msra.mxu0 0.0
    %670 = vmatprep.subr.mxu0 0.0
    %671 = vmatpush1.msra.mxu0 0.0
    %672 = vmatprep.subr.mxu0 0.0
    %673 = vmatpush1.msra.mxu0 0.0
    %674 = vmatprep.subr.mxu0 0.0
    %675 = vmatpush1.msra.mxu0 0.0
    %676 = vmatprep.subr.mxu0 0.0
    %677 = vmatpush1.msra.mxu0 0.0
    %678 = vmatprep.subr.mxu0 0.0
    %679 = vmatpush1.msra.mxu0 0.0
    %680 = vmatprep.subr.mxu0 0.0
    %681 = vmatpush1.msra.mxu0 0.0
    %682 = vmatprep.subr.mxu0 0.0
    %683 = vmatpush1.msra.mxu0 0.0
    %684 = vmatprep.subr.mxu0 0.0
    %685 = vmatpush1.msra.mxu0 0.0
    %686 = vmatprep.subr.mxu0 0.0
    %687 = vmatpush1.msra.mxu0 0.0
    %688 = vmatprep.subr.mxu0 0.0
    %689 = vmatpush1.msra.mxu0 0.0
    %690 = vmatprep.subr.mxu0 0.0
    %691 = vmatpush1.msra.mxu0 0.0
    %692 = vmatprep.subr.mxu0 0.0
    %693 = vmatpush1.msra.mxu0 0.0
    %694 = vmatprep.subr.mxu0 0.0
    %695 = vmatpush1.msra.mxu0 0.0
    %696 = vmatprep.subr.mxu0 0.0
    %697 = vmatpush1.msra.mxu0 0.0
    %698 = vmatprep.mubr.f32.mxu0 0.0
    %699 = vmatmul.mubr.f32.gmra.mrb[0].mxu0 %v632
    %v700 = vpop.f32.mrb[0].mxu0
    %v701 = vadd.f32 %v628, %v700
    %v702 = vpop.f32.mrb[0].mxu0
    %703 = vdwg.mxu0
    %v705 = vlaneseq
    %v706 = vshrl.u32 %v705, 7
    %v707 = vsub.s32 0, %v706
    %v708 = vrot.slane %v95, %v707
    %v710 = vadd.f32 %v701, %v708
    %711 = vst [vmem:[#allocation2] sm:$0x3] %v710
    %s712 = scalar_lea.vmem %s0, 2
    %v713 = vld [vmem:[%s712] sm:$0x3]
    %v714 = vsel %vm254, %v556, 0
    %716 = vmatprep.subr.mxu0 0.0
    %717 = vmatpush1.msra.mxu0 %v52
    %718 = vmatprep.subr.mxu0 0.0
    %719 = vmatpush1.msra.mxu0 %v53
    %720 = vmatprep.subr.mxu0 0.0
    %721 = vmatpush1.msra.mxu0 %v54
    %722 = vmatprep.subr.mxu0 0.0
    %723 = vmatpush1.msra.mxu0 %v55
    %724 = vmatprep.subr.mxu0 0.0
    %725 = vmatpush1.msra.mxu0 0.0
    %726 = vmatprep.subr.mxu0 0.0
    %727 = vmatpush1.msra.mxu0 0.0
    %728 = vmatprep.subr.mxu0 0.0
    %729 = vmatpush1.msra.mxu0 0.0
    %730 = vmatprep.subr.mxu0 0.0
    %731 = vmatpush1.msra.mxu0 0.0
    %732 = vmatprep.subr.mxu0 0.0
    %733 = vmatpush1.msra.mxu0 0.0
    %734 = vmatprep.subr.mxu0 0.0
    %735 = vmatpush1.msra.mxu0 0.0
    %736 = vmatprep.subr.mxu0 0.0
    %737 = vmatpush1.msra.mxu0 0.0
    %738 = vmatprep.subr.mxu0 0.0
    %739 = vmatpush1.msra.mxu0 0.0
    %740 = vmatprep.subr.mxu0 0.0
    %741 = vmatpush1.msra.mxu0 0.0
    %742 = vmatprep.subr.mxu0 0.0
    %743 = vmatpush1.msra.mxu0 0.0
    %744 = vmatprep.subr.mxu0 0.0
    %745 = vmatpush1.msra.mxu0 0.0
    %746 = vmatprep.subr.mxu0 0.0
    %747 = vmatpush1.msra.mxu0 0.0
    %748 = vmatprep.subr.mxu0 0.0
    %749 = vmatpush1.msra.mxu0 0.0
    %750 = vmatprep.subr.mxu0 0.0
    %751 = vmatpush1.msra.mxu0 0.0
    %752 = vmatprep.subr.mxu0 0.0
    %753 = vmatpush1.msra.mxu0 0.0
    %754 = vmatprep.subr.mxu0 0.0
    %755 = vmatpush1.msra.mxu0 0.0
    %756 = vmatprep.subr.mxu0 0.0
    %757 = vmatpush1.msra.mxu0 0.0
    %758 = vmatprep.subr.mxu0 0.0
    %759 = vmatpush1.msra.mxu0 0.0
    %760 = vmatprep.subr.mxu0 0.0
    %761 = vmatpush1.msra.mxu0 0.0
    %762 = vmatprep.subr.mxu0 0.0
    %763 = vmatpush1.msra.mxu0 0.0
    %764 = vmatprep.subr.mxu0 0.0
    %765 = vmatpush1.msra.mxu0 0.0
    %766 = vmatprep.subr.mxu0 0.0
    %767 = vmatpush1.msra.mxu0 0.0
    %768 = vmatprep.subr.mxu0 0.0
    %769 = vmatpush1.msra.mxu0 0.0
    %770 = vmatprep.subr.mxu0 0.0
    %771 = vmatpush1.msra.mxu0 0.0
    %772 = vmatprep.subr.mxu0 0.0
    %773 = vmatpush1.msra.mxu0 0.0
    %774 = vmatprep.subr.mxu0 0.0
    %775 = vmatpush1.msra.mxu0 0.0
    %776 = vmatprep.subr.mxu0 0.0
    %777 = vmatpush1.msra.mxu0 0.0
    %778 = vmatprep.subr.mxu0 0.0
    %779 = vmatpush1.msra.mxu0 0.0
    %780 = vmatprep.mubr.f32.mxu0 0.0
    %781 = vmatmul.mubr.f32.gmra.mrb[0].mxu0 %v714
    %v782 = vpop.f32.mrb[0].mxu0
    %v783 = vadd.f32 %v252, %v782
    %v784 = vpop.f32.mrb[0].mxu0
    %785 = vdwg.mxu0
    %v788 = vunpack.c.l.s4 1966171168
    %v789 = vunpack.c.0.s8 %v788
    %v790 = vlaneseq
    %v791 = vshrl.u32 %v790, 7
    %v792 = vsub.s32 %v789, %v791
    %v793 = vrot.slane %v783, %v792
    %v794 = vcombine.high %v793, %v793
    %v796 = vunpack.c.l.s4 1966171168
    %v797 = vunpack.c.0.s8 %v796
    %v798 = vlaneseq
    %v799 = vshrl.u32 %v798, 7
    %v800 = vsub.s32 %v797, %v799
    %v801 = vrot.slane %v793, %v800
    %v803 = vunpack.c.l.s4 1966171168
    %v804 = vunpack.c.0.s8 %v803
    %v805 = vlaneseq
    %v806 = vshrl.u32 %v805, 7
    %v807 = vsub.s32 %v804, %v806
    %v808 = vrot.slane %v794, %v807
    %v809 = vlaneseq
    %v810 = vshrl.u32 %v809, 7
    %v811 = vsub.s32 0, %v810
    %v812 = vrot.slane %v801, %v811
    %v813 = vlaneseq
    %v814 = vshrl.u32 %v813, 7
    %v815 = vsub.s32 0, %v814
    %v816 = vrot.slane %v808, %v815
    %v819 = vadd.f32 %v169, %v812
    %v820 = vadd.f32 %v244, %v816
    %v821 = vtanh.pop %v819
    %v822 = vtanh.pop %v820
    %v823 = vmul.f32 %v821, %v369
    %v824 = vmul.f32 %v822, %v369
    %v825 = vsel %vm254, %v823, 0.0
    %826 = vadd.xlane.f32.xlu0 %v825
    %v827 = vpop.xlane.xlu0 %826
    %v828 = vsel %vm254, %v824, 0.0
    %829 = vadd.xlane.f32.xlu0 %v828
    %v830 = vpop.xlane.xlu0 %829
    %v831 = vrot.slane %v827, 4
    %v832 = vmax.f32 %v827, %v831
    %v833 = vrot.slane %v832, 2
    %v834 = vmax.f32 %v832, %v833
    %v835 = vrot.slane %v834, 1
    %v836 = vmax.f32 %v834, %v835
    %v837 = vrot.slane %v830, 4
    %v838 = vmax.f32 %v830, %v837
    %v839 = vrot.slane %v838, 2
    %v840 = vmax.f32 %v838, %v839
    %v841 = vrot.slane %v840, 1
    %v842 = vmax.f32 %v840, %v841
    %v843 = vsub.f32 %v827, %v836
    %v844 = vsub.f32 %v830, %v842
    %v845 = vmul.f32 %v843, 1.442695
    %v846 = vpow.pop %v845
    %v847 = vmul.f32 %v844, 1.442695
    %v848 = vpow.pop %v847
    %v849 = vrot.slane %v846, 4
    %v850 = vadd.f32 %v846, %v849
    %v851 = vrot.slane %v850, 2
    %v852 = vadd.f32 %v850, %v851
    %v853 = vrot.slane %v852, 1
    %v854 = vadd.f32 %v852, %v853
    %v855 = vrot.slane %v848, 4
    %v856 = vadd.f32 %v848, %v855
    %v857 = vrot.slane %v856, 2
    %v858 = vadd.f32 %v856, %v857
    %v859 = vrot.slane %v858, 1
    %v860 = vadd.f32 %v858, %v859
    %v861 = vrcp.pop %v854
    %v862 = vmul.f32 %v846, %v861
    %v863 = vrcp.pop %v860
    %v864 = vmul.f32 %v848, %v863
    %v865 = vmul.f32 %v862, %v48
    %v866 = vmul.f32 %v864, %v49
    %v867 = vsel %vm98, %v865, 0.0
    %v868 = vrot.slane %v867, 4
    %v869 = vadd.f32 %v867, %v868
    %v870 = vrot.slane %v869, 2
    %v871 = vadd.f32 %v869, %v870
    %v872 = vrot.slane %v871, 1
    %v873 = vadd.f32 %v871, %v872
    %v874 = vsel %vm98, %v866, 0.0
    %v875 = vrot.slane %v874, 4
    %v876 = vadd.f32 %v874, %v875
    %v877 = vrot.slane %v876, 2
    %v878 = vadd.f32 %v876, %v877
    %v879 = vrot.slane %v878, 1
    %v880 = vadd.f32 %v878, %v879
    %v883 = vsel %vm431, %v880, %v873
    %884 = vrot.lane.b32.xlu0 %v883, 16
    %v885 = vpop.permute.xlu0 %884
    %v887 = vsel %vm98, %v713, %v885
    %888 = vrot.lane.b32.xlu0 %v556, 32
    %v889 = vpop.permute.xlu0 %888
    %v891 = vsel %vm254, %v887, %v889
    %v893 = vsel %vm452, %v891, 0
    %895 = vmatprep.subr.mxu0 %v59
    %896 = vmatpush1.msra.mxu0 %v58
    %897 = vmatprep.subr.mxu0 %v61
    %898 = vmatpush1.msra.mxu0 %v60
    %899 = vmatprep.subr.mxu0 %v63
    %900 = vmatpush1.msra.mxu0 %v62
    %901 = vmatprep.subr.mxu0 %v65
    %902 = vmatpush1.msra.mxu0 %v64
    %903 = vmatprep.subr.mxu0 %v67
    %904 = vmatpush1.msra.mxu0 %v66
    %905 = vmatprep.subr.mxu0 %v69
    %906 = vmatpush1.msra.mxu0 %v68
    %907 = vmatprep.subr.mxu0 %v71
    %908 = vmatpush1.msra.mxu0 %v70
    %909 = vmatprep.subr.mxu0 %v73
    %910 = vmatpush1.msra.mxu0 %v72
    %911 = vmatprep.subr.mxu0 %v75
    %912 = vmatpush1.msra.mxu0 %v74
    %913 = vmatprep.subr.mxu0 %v77
    %914 = vmatpush1.msra.mxu0 %v76
    %915 = vmatprep.subr.mxu0 %v79
    %916 = vmatpush1.msra.mxu0 %v78
    %917 = vmatprep.subr.mxu0 %v81
    %918 = vmatpush1.msra.mxu0 %v80
    %919 = vmatprep.subr.mxu0 0.0
    %920 = vmatpush1.msra.mxu0 0.0
    %921 = vmatprep.subr.mxu0 0.0
    %922 = vmatpush1.msra.mxu0 0.0
    %923 = vmatprep.subr.mxu0 0.0
    %924 = vmatpush1.msra.mxu0 0.0
    %925 = vmatprep.subr.mxu0 0.0
    %926 = vmatpush1.msra.mxu0 0.0
    %927 = vmatprep.subr.mxu0 0.0
    %928 = vmatpush1.msra.mxu0 0.0
    %929 = vmatprep.subr.mxu0 0.0
    %930 = vmatpush1.msra.mxu0 0.0
    %931 = vmatprep.subr.mxu0 0.0
    %932 = vmatpush1.msra.mxu0 0.0
    %933 = vmatprep.subr.mxu0 0.0
    %934 = vmatpush1.msra.mxu0 0.0
    %935 = vmatprep.subr.mxu0 0.0
    %936 = vmatpush1.msra.mxu0 0.0
    %937 = vmatprep.subr.mxu0 0.0
    %938 = vmatpush1.msra.mxu0 0.0
    %939 = vmatprep.subr.mxu0 0.0
    %940 = vmatpush1.msra.mxu0 0.0
    %941 = vmatprep.subr.mxu0 0.0
    %942 = vmatpush1.msra.mxu0 0.0
    %943 = vmatprep.subr.mxu0 0.0
    %944 = vmatpush1.msra.mxu0 0.0
    %945 = vmatprep.subr.mxu0 0.0
    %946 = vmatpush1.msra.mxu0 0.0
    %947 = vmatprep.subr.mxu0 0.0
    %948 = vmatpush1.msra.mxu0 0.0
    %949 = vmatprep.subr.mxu0 0.0
    %950 = vmatpush1.msra.mxu0 0.0
    %951 = vmatprep.subr.mxu0 0.0
    %952 = vmatpush1.msra.mxu0 0.0
    %953 = vmatprep.subr.mxu0 0.0
    %954 = vmatpush1.msra.mxu0 0.0
    %955 = vmatprep.subr.mxu0 0.0
    %956 = vmatpush1.msra.mxu0 0.0
    %957 = vmatprep.subr.mxu0 0.0
    %958 = vmatpush1.msra.mxu0 0.0
    %959 = vmatprep.mubr.f32.mxu0 0.0
    %960 = vmatmul.mubr.f32.gmra.mrb[0].mxu0 %v893
    %v961 = vpop.f32.mrb[0].mxu0
    %v962 = vadd.f32 %v445, %v961
    %v963 = vpop.f32.mrb[0].mxu0
    %v964 = vadd.f32 %v449, %v963
    %965 = vdwg.mxu0
    %v966 = vmul.f32 %v962, 0.5
    %v967 = vmul.f32 %v964, 0.5
    %v968 = vtanh.pop %v966
    %v969 = vtanh.pop %v967
    %v970 = vmul.f32 %v968, 0.5
    %v971 = vmul.f32 %v969, 0.5
    %v972 = vadd.f32 %v970, 0.5
    %v973 = vadd.f32 %v971, 0.5
    %v974 = vtanh.pop %v964
    %v975 = vmul.f32 %v972, %v550
    %977 = vrot.lane.b32.xlu0 %v974, 64
    %v978 = vpop.permute.xlu0 %977
    %v980 = vmul.f32 %v972, %v978
    %982 = vrot.lane.b32.xlu0 %v980, 64
    %v983 = vpop.permute.xlu0 %982
    %v985 = vadd.f32 %v975, %v983
    %v986 = vtanh.pop %v985
    %988 = vrot.lane.b32.xlu0 %v986, 64
    %v989 = vpop.permute.xlu0 %988
    %v991 = vmul.f32 %v973, %v989
    %v993 = vsel %vm557, %v991, 0
    %995 = vmatprep.subr.mxu0 0.0
    %996 = vmatpush1.msra.mxu0 %v87
    %997 = vmatprep.subr.mxu0 0.0
    %998 = vmatpush1.msra.mxu0 %v88
    %999 = vmatprep.subr.mxu0 0.0
    %1000 = vmatpush1.msra.mxu0 %v89
    %1001 = vmatprep.subr.mxu0 0.0
    %1002 = vmatpush1.msra.mxu0 %v90
    %1003 = vmatprep.subr.mxu0 0.0
    %1004 = vmatpush1.msra.mxu0 %v91
    %1005 = vmatprep.subr.mxu0 0.0
    %1006 = vmatpush1.msra.mxu0 %v92
    %1007 = vmatprep.subr.mxu0 0.0
    %1008 = vmatpush1.msra.mxu0 %v93
    %1009 = vmatprep.subr.mxu0 0.0
    %1010 = vmatpush1.msra.mxu0 %v94
    %1011 = vmatprep.subr.mxu0 0.0
    %1012 = vmatpush1.msra.mxu0 0.0
    %1013 = vmatprep.subr.mxu0 0.0
    %1014 = vmatpush1.msra.mxu0 0.0
    %1015 = vmatprep.subr.mxu0 0.0
    %1016 = vmatpush1.msra.mxu0 0.0
    %1017 = vmatprep.subr.mxu0 0.0
    %1018 = vmatpush1.msra.mxu0 0.0
    %1019 = vmatprep.subr.mxu0 0.0
    %1020 = vmatpush1.msra.mxu0 0.0
    %1021 = vmatprep.subr.mxu0 0.0
    %1022 = vmatpush1.msra.mxu0 0.0
    %1023 = vmatprep.subr.mxu0 0.0
    %1024 = vmatpush1.msra.mxu0 0.0
    %1025 = vmatprep.subr.mxu0 0.0
    %1026 = vmatpush1.msra.mxu0 0.0
    %1027 = vmatprep.subr.mxu0 0.0
    %1028 = vmatpush1.msra.mxu0 0.0
    %1029 = vmatprep.subr.mxu0 0.0
    %1030 = vmatpush1.msra.mxu0 0.0
    %1031 = vmatprep.subr.mxu0 0.0
    %1032 = vmatpush1.msra.mxu0 0.0
    %1033 = vmatprep.subr.mxu0 0.0
    %1034 = vmatpush1.msra.mxu0 0.0
    %1035 = vmatprep.subr.mxu0 0.0
    %1036 = vmatpush1.msra.mxu0 0.0
    %1037 = vmatprep.subr.mxu0 0.0
    %1038 = vmatpush1.msra.mxu0 0.0
    %1039 = vmatprep.subr.mxu0 0.0
    %1040 = vmatpush1.msra.mxu0 0.0
    %1041 = vmatprep.subr.mxu0 0.0
    %1042 = vmatpush1.msra.mxu0 0.0
    %1043 = vmatprep.subr.mxu0 0.0
    %1044 = vmatpush1.msra.mxu0 0.0
    %1045 = vmatprep.subr.mxu0 0.0
    %1046 = vmatpush1.msra.mxu0 0.0
    %1047 = vmatprep.subr.mxu0 0.0
    %1048 = vmatpush1.msra.mxu0 0.0
    %1049 = vmatprep.subr.mxu0 0.0
    %1050 = vmatpush1.msra.mxu0 0.0
    %1051 = vmatprep.subr.mxu0 0.0
    %1052 = vmatpush1.msra.mxu0 0.0
    %1053 = vmatprep.subr.mxu0 0.0
    %1054 = vmatpush1.msra.mxu0 0.0
    %1055 = vmatprep.subr.mxu0 0.0
    %1056 = vmatpush1.msra.mxu0 0.0
    %1057 = vmatprep.subr.mxu0 0.0
    %1058 = vmatpush1.msra.mxu0 0.0
    %1059 = vmatprep.mubr.f32.mxu0 0.0
    %1060 = vmatmul.mubr.f32.gmra.mrb[0].mxu0 %v993
    %v1061 = vpop.f32.mrb[0].mxu0
    %v1062 = vadd.f32 0.0, %v1061
    %v1063 = vpop.f32.mrb[0].mxu0
    %1064 = vdwg.mxu0
    %v1066 = vsel %vm254, %v887, 0
    %1068 = vmatprep.subr.mxu0 0.0
    %1069 = vmatpush1.msra.mxu0 %v83
    %1070 = vmatprep.subr.mxu0 0.0
    %1071 = vmatpush1.msra.mxu0 %v84
    %1072 = vmatprep.subr.mxu0 0.0
    %1073 = vmatpush1.msra.mxu0 %v85
    %1074 = vmatprep.subr.mxu0 0.0
    %1075 = vmatpush1.msra.mxu0 %v86
    %1076 = vmatprep.subr.mxu0 0.0
    %1077 = vmatpush1.msra.mxu0 0.0
    %1078 = vmatprep.subr.mxu0 0.0
    %1079 = vmatpush1.msra.mxu0 0.0
    %1080 = vmatprep.subr.mxu0 0.0
    %1081 = vmatpush1.msra.mxu0 0.0
    %1082 = vmatprep.subr.mxu0 0.0
    %1083 = vmatpush1.msra.mxu0 0.0
    %1084 = vmatprep.subr.mxu0 0.0
    %1085 = vmatpush1.msra.mxu0 0.0
    %1086 = vmatprep.subr.mxu0 0.0
    %1087 = vmatpush1.msra.mxu0 0.0
    %1088 = vmatprep.subr.mxu0 0.0
    %1089 = vmatpush1.msra.mxu0 0.0
    %1090 = vmatprep.subr.mxu0 0.0
    %1091 = vmatpush1.msra.mxu0 0.0
    %1092 = vmatprep.subr.mxu0 0.0
    %1093 = vmatpush1.msra.mxu0 0.0
    %1094 = vmatprep.subr.mxu0 0.0
    %1095 = vmatpush1.msra.mxu0 0.0
    %1096 = vmatprep.subr.mxu0 0.0
    %1097 = vmatpush1.msra.mxu0 0.0
    %1098 = vmatprep.subr.mxu0 0.0
    %1099 = vmatpush1.msra.mxu0 0.0
    %1100 = vmatprep.subr.mxu0 0.0
    %1101 = vmatpush1.msra.mxu0 0.0
    %1102 = vmatprep.subr.mxu0 0.0
    %1103 = vmatpush1.msra.mxu0 0.0
    %1104 = vmatprep.subr.mxu0 0.0
    %1105 = vmatpush1.msra.mxu0 0.0
    %1106 = vmatprep.subr.mxu0 0.0
    %1107 = vmatpush1.msra.mxu0 0.0
    %1108 = vmatprep.subr.mxu0 0.0
    %1109 = vmatpush1.msra.mxu0 0.0
    %1110 = vmatprep.subr.mxu0 0.0
    %1111 = vmatpush1.msra.mxu0 0.0
    %1112 = vmatprep.subr.mxu0 0.0
    %1113 = vmatpush1.msra.mxu0 0.0
    %1114 = vmatprep.subr.mxu0 0.0
    %1115 = vmatpush1.msra.mxu0 0.0
    %1116 = vmatprep.subr.mxu0 0.0
    %1117 = vmatpush1.msra.mxu0 0.0
    %1118 = vmatprep.subr.mxu0 0.0
    %1119 = vmatpush1.msra.mxu0 0.0
    %1120 = vmatprep.subr.mxu0 0.0
    %1121 = vmatpush1.msra.mxu0 0.0
    %1122 = vmatprep.subr.mxu0 0.0
    %1123 = vmatpush1.msra.mxu0 0.0
    %1124 = vmatprep.subr.mxu0 0.0
    %1125 = vmatpush1.msra.mxu0 0.0
    %1126 = vmatprep.subr.mxu0 0.0
    %1127 = vmatpush1.msra.mxu0 0.0
    %1128 = vmatprep.subr.mxu0 0.0
    %1129 = vmatpush1.msra.mxu0 0.0
    %1130 = vmatprep.subr.mxu0 0.0
    %1131 = vmatpush1.msra.mxu0 0.0
    %1132 = vmatprep.mubr.f32.mxu0 0.0
    %1133 = vmatmul.mubr.f32.gmra.mrb[0].mxu0 %v1066
    %v1134 = vpop.f32.mrb[0].mxu0
    %v1135 = vadd.f32 %v1062, %v1134
    %v1136 = vpop.f32.mrb[0].mxu0
    %1137 = vdwg.mxu0
    %v1138 = vadd.f32 %v1135, %v708
    %s1139 = scalar_lea.vmem [#allocation2], 2
    %1140 = vst [vmem:[%s1139] sm:$0x3] %v1138
    %s1141 = scalar_lea.vmem %s0, 4
    %v1142 = vld [vmem:[%s1141] sm:$0x3]
    %v1143 = vsel %vm254, %v991, 0
    %1145 = vmatprep.subr.mxu0 0.0
    %1146 = vmatpush1.msra.mxu0 %v52
    %1147 = vmatprep.subr.mxu0 0.0
    %1148 = vmatpush1.msra.mxu0 %v53
    %1149 = vmatprep.subr.mxu0 0.0
    %1150 = vmatpush1.msra.mxu0 %v54
    %1151 = vmatprep.subr.mxu0 0.0
    %1152 = vmatpush1.msra.mxu0 %v55
    %1153 = vmatprep.subr.mxu0 0.0
    %1154 = vmatpush1.msra.mxu0 0.0
    %1155 = vmatprep.subr.mxu0 0.0
    %1156 = vmatpush1.msra.mxu0 0.0
    %1157 = vmatprep.subr.mxu0 0.0
    %1158 = vmatpush1.msra.mxu0 0.0
    %1159 = vmatprep.subr.mxu0 0.0
    %1160 = vmatpush1.msra.mxu0 0.0
    %1161 = vmatprep.subr.mxu0 0.0
    %1162 = vmatpush1.msra.mxu0 0.0
    %1163 = vmatprep.subr.mxu0 0.0
    %1164 = vmatpush1.msra.mxu0 0.0
    %1165 = vmatprep.subr.mxu0 0.0
    %1166 = vmatpush1.msra.mxu0 0.0
    %1167 = vmatprep.subr.mxu0 0.0
    %1168 = vmatpush1.msra.mxu0 0.0
    %1169 = vmatprep.subr.mxu0 0.0
    %1170 = vmatpush1.msra.mxu0 0.0
    %1171 = vmatprep.subr.mxu0 0.0
    %1172 = vmatpush1.msra.mxu0 0.0
    %1173 = vmatprep.subr.mxu0 0.0
    %1174 = vmatpush1.msra.mxu0 0.0
    %1175 = vmatprep.subr.mxu0 0.0
    %1176 = vmatpush1.msra.mxu0 0.0
    %1177 = vmatprep.subr.mxu0 0.0
    %1178 = vmatpush1.msra.mxu0 0.0
    %1179 = vmatprep.subr.mxu0 0.0
    %1180 = vmatpush1.msra.mxu0 0.0
    %1181 = vmatprep.subr.mxu0 0.0
    %1182 = vmatpush1.msra.mxu0 0.0
    %1183 = vmatprep.subr.mxu0 0.0
    %1184 = vmatpush1.msra.mxu0 0.0
    %1185 = vmatprep.subr.mxu0 0.0
    %1186 = vmatpush1.msra.mxu0 0.0
    %1187 = vmatprep.subr.mxu0 0.0
    %1188 = vmatpush1.msra.mxu0 0.0
    %1189 = vmatprep.subr.mxu0 0.0
    %1190 = vmatpush1.msra.mxu0 0.0
    %1191 = vmatprep.subr.mxu0 0.0
    %1192 = vmatpush1.msra.mxu0 0.0
    %1193 = vmatprep.subr.mxu0 0.0
    %1194 = vmatpush1.msra.mxu0 0.0
    %1195 = vmatprep.subr.mxu0 0.0
    %1196 = vmatpush1.msra.mxu0 0.0
    %1197 = vmatprep.subr.mxu0 0.0
    %1198 = vmatpush1.msra.mxu0 0.0
    %1199 = vmatprep.subr.mxu0 0.0
    %1200 = vmatpush1.msra.mxu0 0.0
    %1201 = vmatprep.subr.mxu0 0.0
    %1202 = vmatpush1.msra.mxu0 0.0
    %1203 = vmatprep.subr.mxu0 0.0
    %1204 = vmatpush1.msra.mxu0 0.0
    %1205 = vmatprep.subr.mxu0 0.0
    %1206 = vmatpush1.msra.mxu0 0.0
    %1207 = vmatprep.subr.mxu0 0.0
    %1208 = vmatpush1.msra.mxu0 0.0
    %1209 = vmatprep.mubr.f32.mxu0 0.0
    %1210 = vmatmul.mubr.f32.gmra.mrb[0].mxu0 %v1143
    %v1211 = vpop.f32.mrb[0].mxu0
    %v1212 = vadd.f32 %v252, %v1211
    %v1213 = vpop.f32.mrb[0].mxu0
    %1214 = vdwg.mxu0
    %v1217 = vunpack.c.l.s4 1966171168
    %v1218 = vunpack.c.0.s8 %v1217
    %v1219 = vlaneseq
    %v1220 = vshrl.u32 %v1219, 7
    %v1221 = vsub.s32 %v1218, %v1220
    %v1222 = vrot.slane %v1212, %v1221
    %v1223 = vcombine.high %v1222, %v1222
    %v1225 = vunpack.c.l.s4 1966171168
    %v1226 = vunpack.c.0.s8 %v1225
    %v1227 = vlaneseq
    %v1228 = vshrl.u32 %v1227, 7
    %v1229 = vsub.s32 %v1226, %v1228
    %v1230 = vrot.slane %v1222, %v1229
    %v1232 = vunpack.c.l.s4 1966171168
    %v1233 = vunpack.c.0.s8 %v1232
    %v1234 = vlaneseq
    %v1235 = vshrl.u32 %v1234, 7
    %v1236 = vsub.s32 %v1233, %v1235
    %v1237 = vrot.slane %v1223, %v1236
    %v1238 = vlaneseq
    %v1239 = vshrl.u32 %v1238, 7
    %v1240 = vsub.s32 0, %v1239
    %v1241 = vrot.slane %v1230, %v1240
    %v1242 = vlaneseq
    %v1243 = vshrl.u32 %v1242, 7
    %v1244 = vsub.s32 0, %v1243
    %v1245 = vrot.slane %v1237, %v1244
    %v1248 = vadd.f32 %v169, %v1241
    %v1249 = vadd.f32 %v244, %v1245
    %v1250 = vtanh.pop %v1248
    %v1251 = vtanh.pop %v1249
    %v1252 = vmul.f32 %v1250, %v369
    %v1253 = vmul.f32 %v1251, %v369
    %v1254 = vsel %vm254, %v1252, 0.0
    %1255 = vadd.xlane.f32.xlu0 %v1254
    %v1256 = vpop.xlane.xlu0 %1255
    %v1257 = vsel %vm254, %v1253, 0.0
    %1258 = vadd.xlane.f32.xlu0 %v1257
    %v1259 = vpop.xlane.xlu0 %1258
    %v1260 = vrot.slane %v1256, 4
    %v1261 = vmax.f32 %v1256, %v1260
    %v1262 = vrot.slane %v1261, 2
    %v1263 = vmax.f32 %v1261, %v1262
    %v1264 = vrot.slane %v1263, 1
    %v1265 = vmax.f32 %v1263, %v1264
    %v1266 = vrot.slane %v1259, 4
    %v1267 = vmax.f32 %v1259, %v1266
    %v1268 = vrot.slane %v1267, 2
    %v1269 = vmax.f32 %v1267, %v1268
    %v1270 = vrot.slane %v1269, 1
    %v1271 = vmax.f32 %v1269, %v1270
    %v1272 = vsub.f32 %v1256, %v1265
    %v1273 = vsub.f32 %v1259, %v1271
    %v1274 = vmul.f32 %v1272, 1.442695
    %v1275 = vpow.pop %v1274
    %v1276 = vmul.f32 %v1273, 1.442695
    %v1277 = vpow.pop %v1276
    %v1278 = vrot.slane %v1275, 4
    %v1279 = vadd.f32 %v1275, %v1278
    %v1280 = vrot.slane %v1279, 2
    %v1281 = vadd.f32 %v1279, %v1280
    %v1282 = vrot.slane %v1281, 1
    %v1283 = vadd.f32 %v1281, %v1282
    %v1284 = vrot.slane %v1277, 4
    %v1285 = vadd.f32 %v1277, %v1284
    %v1286 = vrot.slane %v1285, 2
    %v1287 = vadd.f32 %v1285, %v1286
    %v1288 = vrot.slane %v1287, 1
    %v1289 = vadd.f32 %v1287, %v1288
    %v1290 = vrcp.pop %v1283
    %v1291 = vmul.f32 %v1275, %v1290
    %v1292 = vrcp.pop %v1289
    %v1293 = vmul.f32 %v1277, %v1292
    %v1294 = vmul.f32 %v1291, %v48
    %v1295 = vmul.f32 %v1293, %v49
    %v1296 = vsel %vm98, %v1294, 0.0
    %v1297 = vrot.slane %v1296, 4
    %v1298 = vadd.f32 %v1296, %v1297
    %v1299 = vrot.slane %v1298, 2
    %v1300 = vadd.f32 %v1298, %v1299
    %v1301 = vrot.slane %v1300, 1
    %v1302 = vadd.f32 %v1300, %v1301
    %v1303 = vsel %vm98, %v1295, 0.0
    %v1304 = vrot.slane %v1303, 4
    %v1305 = vadd.f32 %v1303, %v1304
    %v1306 = vrot.slane %v1305, 2
    %v1307 = vadd.f32 %v1305, %v1306
    %v1308 = vrot.slane %v1307, 1
    %v1309 = vadd.f32 %v1307, %v1308
    %v1312 = vsel %vm431, %v1309, %v1302
    %1313 = vrot.lane.b32.xlu0 %v1312, 16
    %v1314 = vpop.permute.xlu0 %1313
    %v1316 = vsel %vm98, %v1142, %v1314
    %1317 = vrot.lane.b32.xlu0 %v991, 32
    %v1318 = vpop.permute.xlu0 %1317
    %v1320 = vsel %vm254, %v1316, %v1318
    %v1322 = vsel %vm452, %v1320, 0
    %1324 = vmatprep.subr.mxu0 %v59
    %1325 = vmatpush1.msra.mxu0 %v58
    %1326 = vmatprep.subr.mxu0 %v61
    %1327 = vmatpush1.msra.mxu0 %v60
    %1328 = vmatprep.subr.mxu0 %v63
    %1329 = vmatpush1.msra.mxu0 %v62
    %1330 = vmatprep.subr.mxu0 %v65
    %1331 = vmatpush1.msra.mxu0 %v64
    %1332 = vmatprep.subr.mxu0 %v67
    %1333 = vmatpush1.msra.mxu0 %v66
    %1334 = vmatprep.subr.mxu0 %v69
    %1335 = vmatpush1.msra.mxu0 %v68
    %1336 = vmatprep.subr.mxu0 %v71
    %1337 = vmatpush1.msra.mxu0 %v70
    %1338 = vmatprep.subr.mxu0 %v73
    %1339 = vmatpush1.msra.mxu0 %v72
    %1340 = vmatprep.subr.mxu0 %v75
    %1341 = vmatpush1.msra.mxu0 %v74
    %1342 = vmatprep.subr.mxu0 %v77
    %1343 = vmatpush1.msra.mxu0 %v76
    %1344 = vmatprep.subr.mxu0 %v79
    %1345 = vmatpush1.msra.mxu0 %v78
    %1346 = vmatprep.subr.mxu0 %v81
    %1347 = vmatpush1.msra.mxu0 %v80
    %1348 = vmatprep.subr.mxu0 0.0
    %1349 = vmatpush1.msra.mxu0 0.0
    %1350 = vmatprep.subr.mxu0 0.0
    %1351 = vmatpush1.msra.mxu0 0.0
    %1352 = vmatprep.subr.mxu0 0.0
    %1353 = vmatpush1.msra.mxu0 0.0
    %1354 = vmatprep.subr.mxu0 0.0
    %1355 = vmatpush1.msra.mxu0 0.0
    %1356 = vmatprep.subr.mxu0 0.0
    %1357 = vmatpush1.msra.mxu0 0.0
    %1358 = vmatprep.subr.mxu0 0.0
    %1359 = vmatpush1.msra.mxu0 0.0
    %1360 = vmatprep.subr.mxu0 0.0
    %1361 = vmatpush1.msra.mxu0 0.0
    %1362 = vmatprep.subr.mxu0 0.0
    %1363 = vmatpush1.msra.mxu0 0.0
    %1364 = vmatprep.subr.mxu0 0.0
    %1365 = vmatpush1.msra.mxu0 0.0
    %1366 = vmatprep.subr.mxu0 0.0
    %1367 = vmatpush1.msra.mxu0 0.0
    %1368 = vmatprep.subr.mxu0 0.0
    %1369 = vmatpush1.msra.mxu0 0.0
    %1370 = vmatprep.subr.mxu0 0.0
    %1371 = vmatpush1.msra.mxu0 0.0
    %1372 = vmatprep.subr.mxu0 0.0
    %1373 = vmatpush1.msra.mxu0 0.0
    %1374 = vmatprep.subr.mxu0 0.0
    %1375 = vmatpush1.msra.mxu0 0.0
    %1376 = vmatprep.subr.mxu0 0.0
    %1377 = vmatpush1.msra.mxu0 0.0
    %1378 = vmatprep.subr.mxu0 0.0
    %1379 = vmatpush1.msra.mxu0 0.0
    %1380 = vmatprep.subr.mxu0 0.0
    %1381 = vmatpush1.msra.mxu0 0.0
    %1382 = vmatprep.subr.mxu0 0.0
    %1383 = vmatpush1.msra.mxu0 0.0
    %1384 = vmatprep.subr.mxu0 0.0
    %1385 = vmatpush1.msra.mxu0 0.0
    %1386 = vmatprep.subr.mxu0 0.0
    %1387 = vmatpush1.msra.mxu0 0.0
    %1388 = vmatprep.mubr.f32.mxu0 0.0
    %1389 = vmatmul.mubr.f32.gmra.mrb[0].mxu0 %v1322
    %v1390 = vpop.f32.mrb[0].mxu0
    %v1391 = vadd.f32 %v445, %v1390
    %v1392 = vpop.f32.mrb[0].mxu0
    %v1393 = vadd.f32 %v449, %v1392
    %1394 = vdwg.mxu0
    %v1395 = vmul.f32 %v1391, 0.5
    %v1396 = vmul.f32 %v1393, 0.5
    %v1397 = vtanh.pop %v1395
    %v1398 = vtanh.pop %v1396
    %v1399 = vmul.f32 %v1397, 0.5
    %v1400 = vmul.f32 %v1398, 0.5
    %v1401 = vadd.f32 %v1399, 0.5
    %v1402 = vadd.f32 %v1400, 0.5
    %v1403 = vtanh.pop %v1393
    %v1404 = vmul.f32 %v1401, %v985
    %1406 = vrot.lane.b32.xlu0 %v1403, 64
    %v1407 = vpop.permute.xlu0 %1406
    %v1409 = vmul.f32 %v1401, %v1407
    %1411 = vrot.lane.b32.xlu0 %v1409, 64
    %v1412 = vpop.permute.xlu0 %1411
    %v1414 = vadd.f32 %v1404, %v1412
    %v1415 = vtanh.pop %v1414
    %1417 = vrot.lane.b32.xlu0 %v1415, 64
    %v1418 = vpop.permute.xlu0 %1417
    %v1420 = vmul.f32 %v1402, %v1418
    %v1422 = vsel %vm557, %v1420, 0
    %1424 = vmatprep.subr.mxu0 0.0
    %1425 = vmatpush1.msra.mxu0 %v87
    %1426 = vmatprep.subr.mxu0 0.0
    %1427 = vmatpush1.msra.mxu0 %v88
    %1428 = vmatprep.subr.mxu0 0.0
    %1429 = vmatpush1.msra.mxu0 %v89
    %1430 = vmatprep.subr.mxu0 0.0
    %1431 = vmatpush1.msra.mxu0 %v90
    %1432 = vmatprep.subr.mxu0 0.0
    %1433 = vmatpush1.msra.mxu0 %v91
    %1434 = vmatprep.subr.mxu0 0.0
    %1435 = vmatpush1.msra.mxu0 %v92
    %1436 = vmatprep.subr.mxu0 0.0
    %1437 = vmatpush1.msra.mxu0 %v93
    %1438 = vmatprep.subr.mxu0 0.0
    %1439 = vmatpush1.msra.mxu0 %v94
    %1440 = vmatprep.subr.mxu0 0.0
    %1441 = vmatpush1.msra.mxu0 0.0
    %1442 = vmatprep.subr.mxu0 0.0
    %1443 = vmatpush1.msra.mxu0 0.0
    %1444 = vmatprep.subr.mxu0 0.0
    %1445 = vmatpush1.msra.mxu0 0.0
    %1446 = vmatprep.subr.mxu0 0.0
    %1447 = vmatpush1.msra.mxu0 0.0
    %1448 = vmatprep.subr.mxu0 0.0
    %1449 = vmatpush1.msra.mxu0 0.0
    %1450 = vmatprep.subr.mxu0 0.0
    %1451 = vmatpush1.msra.mxu0 0.0
    %1452 = vmatprep.subr.mxu0 0.0
    %1453 = vmatpush1.msra.mxu0 0.0
    %1454 = vmatprep.subr.mxu0 0.0
    %1455 = vmatpush1.msra.mxu0 0.0
    %1456 = vmatprep.subr.mxu0 0.0
    %1457 = vmatpush1.msra.mxu0 0.0
    %1458 = vmatprep.subr.mxu0 0.0
    %1459 = vmatpush1.msra.mxu0 0.0
    %1460 = vmatprep.subr.mxu0 0.0
    %1461 = vmatpush1.msra.mxu0 0.0
    %1462 = vmatprep.subr.mxu0 0.0
    %1463 = vmatpush1.msra.mxu0 0.0
    %1464 = vmatprep.subr.mxu0 0.0
    %1465 = vmatpush1.msra.mxu0 0.0
    %1466 = vmatprep.subr.mxu0 0.0
    %1467 = vmatpush1.msra.mxu0 0.0
    %1468 = vmatprep.subr.mxu0 0.0
    %1469 = vmatpush1.msra.mxu0 0.0
    %1470 = vmatprep.subr.mxu0 0.0
    %1471 = vmatpush1.msra.mxu0 0.0
    %1472 = vmatprep.subr.mxu0 0.0
    %1473 = vmatpush1.msra.mxu0 0.0
    %1474 = vmatprep.subr.mxu0 0.0
    %1475 = vmatpush1.msra.mxu0 0.0
    %1476 = vmatprep.subr.mxu0 0.0
    %1477 = vmatpush1.msra.mxu0 0.0
    %1478 = vmatprep.subr.mxu0 0.0
    %1479 = vmatpush1.msra.mxu0 0.0
    %1480 = vmatprep.subr.mxu0 0.0
    %1481 = vmatpush1.msra.mxu0 0.0
    %1482 = vmatprep.subr.mxu0 0.0
    %1483 = vmatpush1.msra.mxu0 0.0
    %1484 = vmatprep.subr.mxu0 0.0
    %1485 = vmatpush1.msra.mxu0 0.0
    %1486 = vmatprep.subr.mxu0 0.0
    %1487 = vmatpush1.msra.mxu0 0.0
    %1488 = vmatprep.mubr.f32.mxu0 0.0
    %1489 = vmatmul.mubr.f32.gmra.mrb[0].mxu0 %v1422
    %v1490 = vpop.f32.mrb[0].mxu0
    %v1491 = vadd.f32 0.0, %v1490
    %v1492 = vpop.f32.mrb[0].mxu0
    %1493 = vdwg.mxu0
    %v1495 = vsel %vm254, %v1316, 0
    %1497 = vmatprep.subr.mxu0 0.0
    %1498 = vmatpush1.msra.mxu0 %v83
    %1499 = vmatprep.subr.mxu0 0.0
    %1500 = vmatpush1.msra.mxu0 %v84
    %1501 = vmatprep.subr.mxu0 0.0
    %1502 = vmatpush1.msra.mxu0 %v85
    %1503 = vmatprep.subr.mxu0 0.0
    %1504 = vmatpush1.msra.mxu0 %v86
    %1505 = vmatprep.subr.mxu0 0.0
    %1506 = vmatpush1.msra.mxu0 0.0
    %1507 = vmatprep.subr.mxu0 0.0
    %1508 = vmatpush1.msra.mxu0 0.0
    %1509 = vmatprep.subr.mxu0 0.0
    %1510 = vmatpush1.msra.mxu0 0.0
    %1511 = vmatprep.subr.mxu0 0.0
    %1512 = vmatpush1.msra.mxu0 0.0
    %1513 = vmatprep.subr.mxu0 0.0
    %1514 = vmatpush1.msra.mxu0 0.0
    %1515 = vmatprep.subr.mxu0 0.0
    %1516 = vmatpush1.msra.mxu0 0.0
    %1517 = vmatprep.subr.mxu0 0.0
    %1518 = vmatpush1.msra.mxu0 0.0
    %1519 = vmatprep.subr.mxu0 0.0
    %1520 = vmatpush1.msra.mxu0 0.0
    %1521 = vmatprep.subr.mxu0 0.0
    %1522 = vmatpush1.msra.mxu0 0.0
    %1523 = vmatprep.subr.mxu0 0.0
    %1524 = vmatpush1.msra.mxu0 0.0
    %1525 = vmatprep.subr.mxu0 0.0
    %1526 = vmatpush1.msra.mxu0 0.0
    %1527 = vmatprep.subr.mxu0 0.0
    %1528 = vmatpush1.msra.mxu0 0.0
    %1529 = vmatprep.subr.mxu0 0.0
    %1530 = vmatpush1.msra.mxu0 0.0
    %1531 = vmatprep.subr.mxu0 0.0
    %1532 = vmatpush1.msra.mxu0 0.0
    %1533 = vmatprep.subr.mxu0 0.0
    %1534 = vmatpush1.msra.mxu0 0.0
    %1535 = vmatprep.subr.mxu0 0.0
    %1536 = vmatpush1.msra.mxu0 0.0
    %1537 = vmatprep.subr.mxu0 0.0
    %1538 = vmatpush1.msra.mxu0 0.0
    %1539 = vmatprep.subr.mxu0 0.0
    %1540 = vmatpush1.msra.mxu0 0.0
    %1541 = vmatprep.subr.mxu0 0.0
    %1542 = vmatpush1.msra.mxu0 0.0
    %1543 = vmatprep.subr.mxu0 0.0
    %1544 = vmatpush1.msra.mxu0 0.0
    %1545 = vmatprep.subr.mxu0 0.0
    %1546 = vmatpush1.msra.mxu0 0.0
    %1547 = vmatprep.subr.mxu0 0.0
    %1548 = vmatpush1.msra.mxu0 0.0
    %1549 = vmatprep.subr.mxu0 0.0
    %1550 = vmatpush1.msra.mxu0 0.0
    %1551 = vmatprep.subr.mxu0 0.0
    %1552 = vmatpush1.msra.mxu0 0.0
    %1553 = vmatprep.subr.mxu0 0.0
    %1554 = vmatpush1.msra.mxu0 0.0
    %1555 = vmatprep.subr.mxu0 0.0
    %1556 = vmatpush1.msra.mxu0 0.0
    %1557 = vmatprep.subr.mxu0 0.0
    %1558 = vmatpush1.msra.mxu0 0.0
    %1559 = vmatprep.subr.mxu0 0.0
    %1560 = vmatpush1.msra.mxu0 0.0
    %1561 = vmatprep.mubr.f32.mxu0 0.0
    %1562 = vmatmul.mubr.f32.gmra.mrb[0].mxu0 %v1495
    %v1563 = vpop.f32.mrb[0].mxu0
    %v1564 = vadd.f32 %v1491, %v1563
    %v1565 = vpop.f32.mrb[0].mxu0
    %1566 = vdwg.mxu0
    %v1567 = vadd.f32 %v1564, %v708
    %s1568 = scalar_lea.vmem [#allocation2], 4
    %1569 = vst [vmem:[%s1568] sm:$0x3] %v1567
    %s1570 = scalar_lea.vmem %s0, 6
    %v1571 = vld [vmem:[%s1570] sm:$0x3]
    %v1572 = vsel %vm254, %v1420, 0
    %1574 = vmatprep.subr.mxu0 0.0
    %1575 = vmatpush1.msra.mxu0 %v52
    %1576 = vmatprep.subr.mxu0 0.0
    %1577 = vmatpush1.msra.mxu0 %v53
    %1578 = vmatprep.subr.mxu0 0.0
    %1579 = vmatpush1.msra.mxu0 %v54
    %1580 = vmatprep.subr.mxu0 0.0
    %1581 = vmatpush1.msra.mxu0 %v55
    %1582 = vmatprep.subr.mxu0 0.0
    %1583 = vmatpush1.msra.mxu0 0.0
    %1584 = vmatprep.subr.mxu0 0.0
    %1585 = vmatpush1.msra.mxu0 0.0
    %1586 = vmatprep.subr.mxu0 0.0
    %1587 = vmatpush1.msra.mxu0 0.0
    %1588 = vmatprep.subr.mxu0 0.0
    %1589 = vmatpush1.msra.mxu0 0.0
    %1590 = vmatprep.subr.mxu0 0.0
    %1591 = vmatpush1.msra.mxu0 0.0
    %1592 = vmatprep.subr.mxu0 0.0
    %1593 = vmatpush1.msra.mxu0 0.0
    %1594 = vmatprep.subr.mxu0 0.0
    %1595 = vmatpush1.msra.mxu0 0.0
    %1596 = vmatprep.subr.mxu0 0.0
    %1597 = vmatpush1.msra.mxu0 0.0
    %1598 = vmatprep.subr.mxu0 0.0
    %1599 = vmatpush1.msra.mxu0 0.0
    %1600 = vmatprep.subr.mxu0 0.0
    %1601 = vmatpush1.msra.mxu0 0.0
    %1602 = vmatprep.subr.mxu0 0.0
    %1603 = vmatpush1.msra.mxu0 0.0
    %1604 = vmatprep.subr.mxu0 0.0
    %1605 = vmatpush1.msra.mxu0 0.0
    %1606 = vmatprep.subr.mxu0 0.0
    %1607 = vmatpush1.msra.mxu0 0.0
    %1608 = vmatprep.subr.mxu0 0.0
    %1609 = vmatpush1.msra.mxu0 0.0
    %1610 = vmatprep.subr.mxu0 0.0
    %1611 = vmatpush1.msra.mxu0 0.0
    %1612 = vmatprep.subr.mxu0 0.0
    %1613 = vmatpush1.msra.mxu0 0.0
    %1614 = vmatprep.subr.mxu0 0.0
    %1615 = vmatpush1.msra.mxu0 0.0
    %1616 = vmatprep.subr.mxu0 0.0
    %1617 = vmatpush1.msra.mxu0 0.0
    %1618 = vmatprep.subr.mxu0 0.0
    %1619 = vmatpush1.msra.mxu0 0.0
    %1620 = vmatprep.subr.mxu0 0.0
    %1621 = vmatpush1.msra.mxu0 0.0
    %1622 = vmatprep.subr.mxu0 0.0
    %1623 = vmatpush1.msra.mxu0 0.0
    %1624 = vmatprep.subr.mxu0 0.0
    %1625 = vmatpush1.msra.mxu0 0.0
    %1626 = vmatprep.subr.mxu0 0.0
    %1627 = vmatpush1.msra.mxu0 0.0
    %1628 = vmatprep.subr.mxu0 0.0
    %1629 = vmatpush1.msra.mxu0 0.0
    %1630 = vmatprep.subr.mxu0 0.0
    %1631 = vmatpush1.msra.mxu0 0.0
    %1632 = vmatprep.subr.mxu0 0.0
    %1633 = vmatpush1.msra.mxu0 0.0
    %1634 = vmatprep.subr.mxu0 0.0
    %1635 = vmatpush1.msra.mxu0 0.0
    %1636 = vmatprep.subr.mxu0 0.0
    %1637 = vmatpush1.msra.mxu0 0.0
    %1638 = vmatprep.mubr.f32.mxu0 0.0
    %1639 = vmatmul.mubr.f32.gmra.mrb[0].mxu0 %v1572
    %v1640 = vpop.f32.mrb[0].mxu0
    %v1641 = vadd.f32 %v252, %v1640
    %v1642 = vpop.f32.mrb[0].mxu0
    %1643 = vdwg.mxu0
    %v1646 = vunpack.c.l.s4 1966171168
    %v1647 = vunpack.c.0.s8 %v1646
    %v1648 = vlaneseq
    %v1649 = vshrl.u32 %v1648, 7
    %v1650 = vsub.s32 %v1647, %v1649
    %v1651 = vrot.slane %v1641, %v1650
    %v1652 = vcombine.high %v1651, %v1651
    %v1654 = vunpack.c.l.s4 1966171168
    %v1655 = vunpack.c.0.s8 %v1654
    %v1656 = vlaneseq
    %v1657 = vshrl.u32 %v1656, 7
    %v1658 = vsub.s32 %v1655, %v1657
    %v1659 = vrot.slane %v1651, %v1658
    %v1661 = vunpack.c.l.s4 1966171168
    %v1662 = vunpack.c.0.s8 %v1661
    %v1663 = vlaneseq
    %v1664 = vshrl.u32 %v1663, 7
    %v1665 = vsub.s32 %v1662, %v1664
    %v1666 = vrot.slane %v1652, %v1665
    %v1667 = vlaneseq
    %v1668 = vshrl.u32 %v1667, 7
    %v1669 = vsub.s32 0, %v1668
    %v1670 = vrot.slane %v1659, %v1669
    %v1671 = vlaneseq
    %v1672 = vshrl.u32 %v1671, 7
    %v1673 = vsub.s32 0, %v1672
    %v1674 = vrot.slane %v1666, %v1673
    %v1677 = vadd.f32 %v169, %v1670
    %v1678 = vadd.f32 %v244, %v1674
    %v1679 = vtanh.pop %v1677
    %v1680 = vtanh.pop %v1678
    %v1681 = vmul.f32 %v1679, %v369
    %v1682 = vmul.f32 %v1680, %v369
    %v1683 = vsel %vm254, %v1681, 0.0
    %1684 = vadd.xlane.f32.xlu0 %v1683
    %v1685 = vpop.xlane.xlu0 %1684
    %v1686 = vsel %vm254, %v1682, 0.0
    %1687 = vadd.xlane.f32.xlu0 %v1686
    %v1688 = vpop.xlane.xlu0 %1687
    %v1689 = vrot.slane %v1685, 4
    %v1690 = vmax.f32 %v1685, %v1689
    %v1691 = vrot.slane %v1690, 2
    %v1692 = vmax.f32 %v1690, %v1691
    %v1693 = vrot.slane %v1692, 1
    %v1694 = vmax.f32 %v1692, %v1693
    %v1695 = vrot.slane %v1688, 4
    %v1696 = vmax.f32 %v1688, %v1695
    %v1697 = vrot.slane %v1696, 2
    %v1698 = vmax.f32 %v1696, %v1697
    %v1699 = vrot.slane %v1698, 1
    %v1700 = vmax.f32 %v1698, %v1699
    %v1701 = vsub.f32 %v1685, %v1694
    %v1702 = vsub.f32 %v1688, %v1700
    %v1703 = vmul.f32 %v1701, 1.442695
    %v1704 = vpow.pop %v1703
    %v1705 = vmul.f32 %v1702, 1.442695
    %v1706 = vpow.pop %v1705
    %v1707 = vrot.slane %v1704, 4
    %v1708 = vadd.f32 %v1704, %v1707
    %v1709 = vrot.slane %v1708, 2
    %v1710 = vadd.f32 %v1708, %v1709
    %v1711 = vrot.slane %v1710, 1
    %v1712 = vadd.f32 %v1710, %v1711
    %v1713 = vrot.slane %v1706, 4
    %v1714 = vadd.f32 %v1706, %v1713
    %v1715 = vrot.slane %v1714, 2
    %v1716 = vadd.f32 %v1714, %v1715
    %v1717 = vrot.slane %v1716, 1
    %v1718 = vadd.f32 %v1716, %v1717
    %v1719 = vrcp.pop %v1712
    %v1720 = vmul.f32 %v1704, %v1719
    %v1721 = vrcp.pop %v1718
    %v1722 = vmul.f32 %v1706, %v1721
    %v1723 = vmul.f32 %v1720, %v48
    %v1724 = vmul.f32 %v1722, %v49
    %v1725 = vsel %vm98, %v1723, 0.0
    %v1726 = vrot.slane %v1725, 4
    %v1727 = vadd.f32 %v1725, %v1726
    %v1728 = vrot.slane %v1727, 2
    %v1729 = vadd.f32 %v1727, %v1728
    %v1730 = vrot.slane %v1729, 1
    %v1731 = vadd.f32 %v1729, %v1730
    %v1732 = vsel %vm98, %v1724, 0.0
    %v1733 = vrot.slane %v1732, 4
    %v1734 = vadd.f32 %v1732, %v1733
    %v1735 = vrot.slane %v1734, 2
    %v1736 = vadd.f32 %v1734, %v1735
    %v1737 = vrot.slane %v1736, 1
    %v1738 = vadd.f32 %v1736, %v1737
    %v1741 = vsel %vm431, %v1738, %v1731
    %1742 = vrot.lane.b32.xlu0 %v1741, 16
    %v1743 = vpop.permute.xlu0 %1742
    %v1745 = vsel %vm98, %v1571, %v1743
    %1746 = vrot.lane.b32.xlu0 %v1420, 32
    %v1747 = vpop.permute.xlu0 %1746
    %v1749 = vsel %vm254, %v1745, %v1747
    %v1751 = vsel %vm452, %v1749, 0
    %1753 = vmatprep.subr.mxu0 %v59
    %1754 = vmatpush1.msra.mxu0 %v58
    %1755 = vmatprep.subr.mxu0 %v61
    %1756 = vmatpush1.msra.mxu0 %v60
    %1757 = vmatprep.subr.mxu0 %v63
    %1758 = vmatpush1.msra.mxu0 %v62
    %1759 = vmatprep.subr.mxu0 %v65
    %1760 = vmatpush1.msra.mxu0 %v64
    %1761 = vmatprep.subr.mxu0 %v67
    %1762 = vmatpush1.msra.mxu0 %v66
    %1763 = vmatprep.subr.mxu0 %v69
    %1764 = vmatpush1.msra.mxu0 %v68
    %1765 = vmatprep.subr.mxu0 %v71
    %1766 = vmatpush1.msra.mxu0 %v70
    %1767 = vmatprep.subr.mxu0 %v73
    %1768 = vmatpush1.msra.mxu0 %v72
    %1769 = vmatprep.subr.mxu0 %v75
    %1770 = vmatpush1.msra.mxu0 %v74
    %1771 = vmatprep.subr.mxu0 %v77
    %1772 = vmatpush1.msra.mxu0 %v76
    %1773 = vmatprep.subr.mxu0 %v79
    %1774 = vmatpush1.msra.mxu0 %v78
    %1775 = vmatprep.subr.mxu0 %v81
    %1776 = vmatpush1.msra.mxu0 %v80
    %1777 = vmatprep.subr.mxu0 0.0
    %1778 = vmatpush1.msra.mxu0 0.0
    %1779 = vmatprep.subr.mxu0 0.0
    %1780 = vmatpush1.msra.mxu0 0.0
    %1781 = vmatprep.subr.mxu0 0.0
    %1782 = vmatpush1.msra.mxu0 0.0
    %1783 = vmatprep.subr.mxu0 0.0
    %1784 = vmatpush1.msra.mxu0 0.0
    %1785 = vmatprep.subr.mxu0 0.0
    %1786 = vmatpush1.msra.mxu0 0.0
    %1787 = vmatprep.subr.mxu0 0.0
    %1788 = vmatpush1.msra.mxu0 0.0
    %1789 = vmatprep.subr.mxu0 0.0
    %1790 = vmatpush1.msra.mxu0 0.0
    %1791 = vmatprep.subr.mxu0 0.0
    %1792 = vmatpush1.msra.mxu0 0.0
    %1793 = vmatprep.subr.mxu0 0.0
    %1794 = vmatpush1.msra.mxu0 0.0
    %1795 = vmatprep.subr.mxu0 0.0
    %1796 = vmatpush1.msra.mxu0 0.0
    %1797 = vmatprep.subr.mxu0 0.0
    %1798 = vmatpush1.msra.mxu0 0.0
    %1799 = vmatprep.subr.mxu0 0.0
    %1800 = vmatpush1.msra.mxu0 0.0
    %1801 = vmatprep.subr.mxu0 0.0
    %1802 = vmatpush1.msra.mxu0 0.0
    %1803 = vmatprep.subr.mxu0 0.0
    %1804 = vmatpush1.msra.mxu0 0.0
    %1805 = vmatprep.subr.mxu0 0.0
    %1806 = vmatpush1.msra.mxu0 0.0
    %1807 = vmatprep.subr.mxu0 0.0
    %1808 = vmatpush1.msra.mxu0 0.0
    %1809 = vmatprep.subr.mxu0 0.0
    %1810 = vmatpush1.msra.mxu0 0.0
    %1811 = vmatprep.subr.mxu0 0.0
    %1812 = vmatpush1.msra.mxu0 0.0
    %1813 = vmatprep.subr.mxu0 0.0
    %1814 = vmatpush1.msra.mxu0 0.0
    %1815 = vmatprep.subr.mxu0 0.0
    %1816 = vmatpush1.msra.mxu0 0.0
    %1817 = vmatprep.mubr.f32.mxu0 0.0
    %1818 = vmatmul.mubr.f32.gmra.mrb[0].mxu0 %v1751
    %v1819 = vpop.f32.mrb[0].mxu0
    %v1820 = vadd.f32 %v445, %v1819
    %v1821 = vpop.f32.mrb[0].mxu0
    %v1822 = vadd.f32 %v449, %v1821
    %1823 = vdwg.mxu0
    %v1824 = vmul.f32 %v1820, 0.5
    %v1825 = vmul.f32 %v1822, 0.5
    %v1826 = vtanh.pop %v1824
    %v1827 = vtanh.pop %v1825
    %v1828 = vmul.f32 %v1826, 0.5
    %v1829 = vmul.f32 %v1827, 0.5
    %v1830 = vadd.f32 %v1828, 0.5
    %v1831 = vadd.f32 %v1829, 0.5
    %v1832 = vtanh.pop %v1822
    %v1833 = vmul.f32 %v1830, %v1414
    %1835 = vrot.lane.b32.xlu0 %v1832, 64
    %v1836 = vpop.permute.xlu0 %1835
    %v1838 = vmul.f32 %v1830, %v1836
    %1840 = vrot.lane.b32.xlu0 %v1838, 64
    %v1841 = vpop.permute.xlu0 %1840
    %v1843 = vadd.f32 %v1833, %v1841
    %v1844 = vtanh.pop %v1843
    %1846 = vrot.lane.b32.xlu0 %v1844, 64
    %v1847 = vpop.permute.xlu0 %1846
    %v1849 = vmul.f32 %v1831, %v1847
    %v1851 = vsel %vm557, %v1849, 0
    %1853 = vmatprep.subr.mxu0 0.0
    %1854 = vmatpush1.msra.mxu0 %v87
    %1855 = vmatprep.subr.mxu0 0.0
    %1856 = vmatpush1.msra.mxu0 %v88
    %1857 = vmatprep.subr.mxu0 0.0
    %1858 = vmatpush1.msra.mxu0 %v89
    %1859 = vmatprep.subr.mxu0 0.0
    %1860 = vmatpush1.msra.mxu0 %v90
    %1861 = vmatprep.subr.mxu0 0.0
    %1862 = vmatpush1.msra.mxu0 %v91
    %1863 = vmatprep.subr.mxu0 0.0
    %1864 = vmatpush1.msra.mxu0 %v92
    %1865 = vmatprep.subr.mxu0 0.0
    %1866 = vmatpush1.msra.mxu0 %v93
    %1867 = vmatprep.subr.mxu0 0.0
    %1868 = vmatpush1.msra.mxu0 %v94
    %1869 = vmatprep.subr.mxu0 0.0
    %1870 = vmatpush1.msra.mxu0 0.0
    %1871 = vmatprep.subr.mxu0 0.0
    %1872 = vmatpush1.msra.mxu0 0.0
    %1873 = vmatprep.subr.mxu0 0.0
    %1874 = vmatpush1.msra.mxu0 0.0
    %1875 = vmatprep.subr.mxu0 0.0
    %1876 = vmatpush1.msra.mxu0 0.0
    %1877 = vmatprep.subr.mxu0 0.0
    %1878 = vmatpush1.msra.mxu0 0.0
    %1879 = vmatprep.subr.mxu0 0.0
    %1880 = vmatpush1.msra.mxu0 0.0
    %1881 = vmatprep.subr.mxu0 0.0
    %1882 = vmatpush1.msra.mxu0 0.0
    %1883 = vmatprep.subr.mxu0 0.0
    %1884 = vmatpush1.msra.mxu0 0.0
    %1885 = vmatprep.subr.mxu0 0.0
    %1886 = vmatpush1.msra.mxu0 0.0
    %1887 = vmatprep.subr.mxu0 0.0
    %1888 = vmatpush1.msra.mxu0 0.0
    %1889 = vmatprep.subr.mxu0 0.0
    %1890 = vmatpush1.msra.mxu0 0.0
    %1891 = vmatprep.subr.mxu0 0.0
    %1892 = vmatpush1.msra.mxu0 0.0
    %1893 = vmatprep.subr.mxu0 0.0
    %1894 = vmatpush1.msra.mxu0 0.0
    %1895 = vmatprep.subr.mxu0 0.0
    %1896 = vmatpush1.msra.mxu0 0.0
    %1897 = vmatprep.subr.mxu0 0.0
    %1898 = vmatpush1.msra.mxu0 0.0
    %1899 = vmatprep.subr.mxu0 0.0
    %1900 = vmatpush1.msra.mxu0 0.0
    %1901 = vmatprep.subr.mxu0 0.0
    %1902 = vmatpush1.msra.mxu0 0.0
    %1903 = vmatprep.subr.mxu0 0.0
    %1904 = vmatpush1.msra.mxu0 0.0
    %1905 = vmatprep.subr.mxu0 0.0
    %1906 = vmatpush1.msra.mxu0 0.0
    %1907 = vmatprep.subr.mxu0 0.0
    %1908 = vmatpush1.msra.mxu0 0.0
    %1909 = vmatprep.subr.mxu0 0.0
    %1910 = vmatpush1.msra.mxu0 0.0
    %1911 = vmatprep.subr.mxu0 0.0
    %1912 = vmatpush1.msra.mxu0 0.0
    %1913 = vmatprep.subr.mxu0 0.0
    %1914 = vmatpush1.msra.mxu0 0.0
    %1915 = vmatprep.subr.mxu0 0.0
    %1916 = vmatpush1.msra.mxu0 0.0
    %1917 = vmatprep.mubr.f32.mxu0 0.0
    %1918 = vmatmul.mubr.f32.gmra.mrb[0].mxu0 %v1851
    %v1919 = vpop.f32.mrb[0].mxu0
    %v1920 = vadd.f32 0.0, %v1919
    %v1921 = vpop.f32.mrb[0].mxu0
    %1922 = vdwg.mxu0
    %v1924 = vsel %vm254, %v1745, 0
    %1926 = vmatprep.subr.mxu0 0.0
    %1927 = vmatpush1.msra.mxu0 %v83
    %1928 = vmatprep.subr.mxu0 0.0
    %1929 = vmatpush1.msra.mxu0 %v84
    %1930 = vmatprep.subr.mxu0 0.0
    %1931 = vmatpush1.msra.mxu0 %v85
    %1932 = vmatprep.subr.mxu0 0.0
    %1933 = vmatpush1.msra.mxu0 %v86
    %1934 = vmatprep.subr.mxu0 0.0
    %1935 = vmatpush1.msra.mxu0 0.0
    %1936 = vmatprep.subr.mxu0 0.0
    %1937 = vmatpush1.msra.mxu0 0.0
    %1938 = vmatprep.subr.mxu0 0.0
    %1939 = vmatpush1.msra.mxu0 0.0
    %1940 = vmatprep.subr.mxu0 0.0
    %1941 = vmatpush1.msra.mxu0 0.0
    %1942 = vmatprep.subr.mxu0 0.0
    %1943 = vmatpush1.msra.mxu0 0.0
    %1944 = vmatprep.subr.mxu0 0.0
    %1945 = vmatpush1.msra.mxu0 0.0
    %1946 = vmatprep.subr.mxu0 0.0
    %1947 = vmatpush1.msra.mxu0 0.0
    %1948 = vmatprep.subr.mxu0 0.0
    %1949 = vmatpush1.msra.mxu0 0.0
    %1950 = vmatprep.subr.mxu0 0.0
    %1951 = vmatpush1.msra.mxu0 0.0
    %1952 = vmatprep.subr.mxu0 0.0
    %1953 = vmatpush1.msra.mxu0 0.0
    %1954 = vmatprep.subr.mxu0 0.0
    %1955 = vmatpush1.msra.mxu0 0.0
    %1956 = vmatprep.subr.mxu0 0.0
    %1957 = vmatpush1.msra.mxu0 0.0
    %1958 = vmatprep.subr.mxu0 0.0
    %1959 = vmatpush1.msra.mxu0 0.0
    %1960 = vmatprep.subr.mxu0 0.0
    %1961 = vmatpush1.msra.mxu0 0.0
    %1962 = vmatprep.subr.mxu0 0.0
    %1963 = vmatpush1.msra.mxu0 0.0
    %1964 = vmatprep.subr.mxu0 0.0
    %1965 = vmatpush1.msra.mxu0 0.0
    %1966 = vmatprep.subr.mxu0 0.0
    %1967 = vmatpush1.msra.mxu0 0.0
    %1968 = vmatprep.subr.mxu0 0.0
    %1969 = vmatpush1.msra.mxu0 0.0
    %1970 = vmatprep.subr.mxu0 0.0
    %1971 = vmatpush1.msra.mxu0 0.0
    %1972 = vmatprep.subr.mxu0 0.0
    %1973 = vmatpush1.msra.mxu0 0.0
    %1974 = vmatprep.subr.mxu0 0.0
    %1975 = vmatpush1.msra.mxu0 0.0
    %1976 = vmatprep.subr.mxu0 0.0
    %1977 = vmatpush1.msra.mxu0 0.0
    %1978 = vmatprep.subr.mxu0 0.0
    %1979 = vmatpush1.msra.mxu0 0.0
    %1980 = vmatprep.subr.mxu0 0.0
    %1981 = vmatpush1.msra.mxu0 0.0
    %1982 = vmatprep.subr.mxu0 0.0
    %1983 = vmatpush1.msra.mxu0 0.0
    %1984 = vmatprep.subr.mxu0 0.0
    %1985 = vmatpush1.msra.mxu0 0.0
    %1986 = vmatprep.subr.mxu0 0.0
    %1987 = vmatpush1.msra.mxu0 0.0
    %1988 = vmatprep.subr.mxu0 0.0
    %1989 = vmatpush1.msra.mxu0 0.0
    %1990 = vmatprep.mubr.f32.mxu0 0.0
    %1991 = vmatmul.mubr.f32.gmra.mrb[0].mxu0 %v1924
    %v1992 = vpop.f32.mrb[0].mxu0
    %v1993 = vadd.f32 %v1920, %v1992
    %v1994 = vpop.f32.mrb[0].mxu0
    %1995 = vdwg.mxu0
    %v1996 = vadd.f32 %v1993, %v708
    %s1997 = scalar_lea.vmem [#allocation2], 6
    %1998 = vst [vmem:[%s1997] sm:$0x3] %v1996
    %vm1999 = vcmask 517120
    %2000 = vst.msk [vmem:[%s14] sm:$0x3] %vm1999, %v1849
    %2002 = vrot.lane.b32.xlu0 %v1843, 64
    %v2003 = vpop.permute.xlu0 %2002
    %2005 = vst.msk [vmem:[%s15] sm:$0x3] %vm1999, %v2003
    // Predicated region
    $region54: #{decoder_forward.1} parent=1 // pred_check
      _
    $region55: #{decoder_forward.1} parent=1 // pred_check_branch
      %2007 = sbr.rel (0) target = $region57
    $region56: #{decoder_forward.1} parent=1 // pred_region
      %s2009 = ssub.s32 128, 128
      %2010 = vsyncadd [#allocation3], %s2009
      %s2011 = sshll.u32 [#allocation2], 4
      %s2012 = int_to_ptr.vmem [resolvable:$true] %s2011
      %2017 = dma.vmem_to_hbm [thread:$0]  %s2012, 128, %s13, [#allocation3], 32, 32, 2
    $region57: #{decoder_forward.1} parent=1 // pred_fallthru
      _
    // Predicated region
    $region58: #{decoder_forward.1} parent=1 // pred_check
      _
    $region59: #{decoder_forward.1} parent=1 // pred_check_branch
      %2019 = sbr.rel (0) target = $region61
    $region60: #{decoder_forward.1} parent=1 // pred_region
      _
    $region61: #{decoder_forward.1} parent=1 // pred_fallthru
      _
    // Predicated region
    $region62: #{decoder_forward.1} parent=1 // pred_check
      _
    $region63: #{decoder_forward.1} parent=1 // pred_check_branch
      %2021 = sbr.rel (0) target = $region65
    $region64: #{decoder_forward.1} parent=1 // pred_region
      _
    $region65: #{decoder_forward.1} parent=1 // pred_fallthru
      _
    // Predicated region
    $region66: #{decoder_forward.1} parent=1 // pred_check
      _
    $region67: #{decoder_forward.1} parent=1 // pred_check_branch
      %2023 = sbr.rel (0) target = $region69
    $region68: #{decoder_forward.1} parent=1 // pred_region
      %2024 = dma.done [#allocation3], 128
    $region69: #{decoder_forward.1} parent=1 // pred_fallthru
      _
    // Predicated region
    $region70: #{decoder_forward.1} parent=1 // pred_check
      _
    $region71: #{decoder_forward.1} parent=1 // pred_check_branch
      %2026 = sbr.rel (0) target = $region73
    $region72: #{decoder_forward.1} parent=1 // pred_region
      _
    $region73: #{decoder_forward.1} parent=1 // pred_fallthru
      _
    // Predicated region
    $region74: #{decoder_forward.1} parent=1 // pred_check
      _
    $region75: #{decoder_forward.1} parent=1 // pred_check_branch
      %2028 = sbr.rel (0) target = $region77
    $region76: #{decoder_forward.1} parent=1 // pred_region
      _
    $region77: #{decoder_forward.1} parent=1 // pred_fallthru
      _
    %2029 = vsyncpa [#allocation3], 1

</llo_original>
